<compile_context>
chip_gen: v7x
topology: tpu7x:2x2x1
jax: 0.10.0
libtpu: 0.0.40
codegen_flags: <defaults>
</compile_context>

<pallas_src>
import numpy as np
import jax
import jax.numpy as jnp
from jax.experimental import pallas as pl
from jax.experimental.pallas import tpu as pltpu

EPS = 1e-5


# ----------------------------------------------------------------------------
# Wrapper-side (one-time) weight / layout transforms
# ----------------------------------------------------------------------------
def _band_matrices(w_hwio, W):
    """(3,3,Cin,Cout) HWIO conv weight -> (3, W*Cin, W*Cout) banded matrices.

    M[dy][(w_in, ci), (w_out, co)] = w[dy, w_in - w_out + 1, ci, co] when the
    dx index is in {0,1,2}, else 0.  Row r_in of the image (flattened to
    W*Cin lanes) @ M[dy] gives that row's contribution to output row
    h = r_in - (dy - 1).  W-boundary zero padding is implicit in the band.
    """
    Cin, Cout = w_hwio.shape[2], w_hwio.shape[3]
    win = jnp.arange(W)[:, None]          # w_in
    wout = jnp.arange(W)[None, :]         # w_out
    dx = win - wout + 1                   # (W, W)
    valid = ((dx >= 0) & (dx <= 2)).astype(w_hwio.dtype)
    dxc = jnp.clip(dx, 0, 2)
    m = w_hwio[:, dxc, :, :]              # (3, w_in, w_out, Cin, Cout)
    m = m * valid[None, :, :, None, None]
    m = m.transpose(0, 1, 3, 2, 4)        # (3, w_in, Cin, w_out, Cout)
    return m.reshape(3, W * Cin, W * Cout)


def _pack_nchw_to_slab(x_nchw):
    N, C, H, W = x_nchw.shape
    return jnp.transpose(x_nchw, (0, 2, 3, 1)).reshape(N * H, W * C)


def _unpack_slab_to_nchw(slab, N, H, W, C):
    return jnp.transpose(slab.reshape(N, H, W, C), (0, 3, 1, 2))


# ----------------------------------------------------------------------------
# Fused kernel
# ----------------------------------------------------------------------------
def _make_kernel(N, H, W, Cin, Cout):
    NH = N * H
    WCin = W * Cin

    def kernel(x_ref, m1_ref, g1_ref, b1_ref, m2_ref, g2_ref, b2_ref, p_ref,
               o_ref):
        # x_ref : (N*H, W*Cin) f32   lane-dense packed input slab
        # m*_ref: (3, W*Cin, W*Cout) bf16 banded conv matrices (one per dy)
        # g*/b* : (1, W*Cout) f32    per-channel BN gamma/beta, tiled over w
        # p_ref : (W*Cout, W*Cout) f32  channel-group averaging matrix (/NHW)
        # o_ref : (N*H, W*Cout) f32
        x = x_ref[...]

        row = jax.lax.broadcasted_iota(jnp.int32, (NH, WCin), 0) % H
        top = row == 0          # output rows with no row above (h == 0)
        bot = row == H - 1      # output rows with no row below (h == H-1)

        def conv3x3(v, m_ref):
            # 3x3 conv = 3 banded matmuls; H-shift via sublane roll + mask.
            up = jnp.where(top, 0.0, pltpu.roll(v, 1, axis=0)
                           ).astype(jnp.bfloat16)            # row h-1
            ct = v.astype(jnp.bfloat16)                      # row h
            dn = jnp.where(bot, 0.0, pltpu.roll(v, NH - 1, axis=0)
                           ).astype(jnp.bfloat16)            # row h+1 (== roll -1)
            acc = jnp.dot(up, m_ref[0], preferred_element_type=jnp.float32)
            acc = acc + jnp.dot(ct, m_ref[1], preferred_element_type=jnp.float32)
            acc = acc + jnp.dot(dn, m_ref[2], preferred_element_type=jnp.float32)
            return acc                                       # (NH, W*Cout) f32

        def batchnorm(y, g_ref, b_ref):
            # training-mode BN: biased batch variance over (N, H, W) per channel.
            s = jnp.sum(y, axis=0, keepdims=True)            # (1, W*Cout)
            ss = jnp.sum(y * y, axis=0, keepdims=True)       # (1, W*Cout)
            mean = jnp.dot(s, p_ref[...], preferred_element_type=jnp.float32)
            ex2 = jnp.dot(ss, p_ref[...], preferred_element_type=jnp.float32)
            var = ex2 - mean * mean
            inv = jax.lax.rsqrt(var + EPS)
            return (y - mean) * (inv * g_ref[...]) + b_ref[...]

        y = conv3x3(x, m1_ref)                               # conv1
        y = jnp.maximum(batchnorm(y, g1_ref, b1_ref), 0.0)   # bn1 + relu
        z = conv3x3(y, m2_ref)                               # conv2
        z = batchnorm(z, g2_ref, b2_ref)                     # bn2
        o_ref[...] = jnp.maximum(z + x, 0.0)                 # + identity, relu

    return kernel


# ----------------------------------------------------------------------------
# Public wrapper (NCHW in / NCHW out, PyTorch convention)
# ----------------------------------------------------------------------------
def basic_block_forward(x_nchw, params):
    w1, g1, b1, w2, g2, b2 = params
    N, C, H, W = x_nchw.shape
    Cin, Cout = w1.shape[2], w1.shape[3]
    # Guard: this kernel implements the stride=1 / downsample=False config only.
    assert Cin == C and Cout == Cin, "identity residual requires Cin == Cout"

    NH, WCout = N * H, W * Cout

    # One fused transpose+reshape into the lane-dense slab (no jnp.pad needed).
    x_slab = _pack_nchw_to_slab(x_nchw.astype(jnp.float32))

    # One-time weight/layout transforms (in a real model, precompute these once).
    m1 = _band_matrices(w1, W).astype(jnp.bfloat16)
    m2 = _band_matrices(w2, W).astype(jnp.bfloat16)
    g1p = jnp.tile(g1.reshape(1, 1, Cout), (1, W, 1)).reshape(1, WCout)
    b1p = jnp.tile(b1.reshape(1, 1, Cout), (1, W, 1)).reshape(1, WCout)
    g2p = jnp.tile(g2.reshape(1, 1, Cout), (1, W, 1)).reshape(1, WCout)
    b2p = jnp.tile(b2.reshape(1, 1, Cout), (1, W, 1)).reshape(1, WCout)
    pmat = jnp.tile(jnp.eye(Cout, dtype=jnp.float32), (W, W)) / float(N * H * W)

    kernel = _make_kernel(N, H, W, Cin, Cout)
    vmem_spec = pl.BlockSpec(memory_space=pltpu.MemorySpace.VMEM)

    out_slab = pl.pallas_call(
        kernel,
        out_shape=jax.ShapeDtypeStruct((NH, WCout), jnp.float32),
        in_specs=[vmem_spec] * 8,
        out_specs=vmem_spec,
    )(x_slab, m1, g1p, b1p, m2, g2p, b2p, pmat)

    return _unpack_slab_to_nchw(out_slab, N, H, W, Cout)


# ----------------------------------------------------------------------------
# Params + plain-JAX reference (same bf16-conv / f32-accumulate policy)
# ----------------------------------------------------------------------------
def init_params(key, in_channels, out_channels):
    k1, k2, k3, k4, k5, k6 = jax.random.split(key, 6)
    w1 = 0.1 * jax.random.normal(k1, (3, 3, in_channels, out_channels), jnp.float32)
    w2 = 0.1 * jax.random.normal(k2, (3, 3, out_channels, out_channels), jnp.float32)
    g1 = 1.0 + 0.1 * jax.random.normal(k3, (out_channels,), jnp.float32)
    b1 = 0.1 * jax.random.normal(k4, (out_channels,), jnp.float32)
    g2 = 1.0 + 0.1 * jax.random.normal(k5, (out_channels,), jnp.float32)
    b2 = 0.1 * jax.random.normal(k6, (out_channels,), jnp.float32)
    return (w1, g1, b1, w2, g2, b2)


def basic_block_ref(x_nchw, params):
    w1, g1, b1, w2, g2, b2 = params
    x = jnp.transpose(x_nchw, (0, 2, 3, 1)).astype(jnp.float32)
    dn = jax.lax.conv_dimension_numbers(x.shape, w1.shape, ("NHWC", "HWIO", "NHWC"))

    def conv(v, w):   # same precision policy as the kernel: bf16 operands, f32 acc
        return jax.lax.conv_general_dilated(
            v.astype(jnp.bfloat16), w.astype(jnp.bfloat16), (1, 1), "SAME",
            dimension_numbers=dn, preferred_element_type=jnp.float32)

    def bn(v, g, b):
        mean = jnp.mean(v, axis=(0, 1, 2), keepdims=True)
        var = jnp.mean((v - mean) ** 2, axis=(0, 1, 2), keepdims=True)
        return ((v - mean) * jax.lax.rsqrt(var + EPS)
                * g.reshape(1, 1, 1, -1) + b.reshape(1, 1, 1, -1))

    y = jax.nn.relu(bn(conv(x, w1), g1, b1))
    z = bn(conv(y, w2), g2, b2)
    out = jax.nn.relu(z + x)
    return jnp.transpose(out, (0, 3, 1, 2))


if __name__ == "__main__":
    key = jax.random.PRNGKey(0)
    kx, kp = jax.random.split(key)

    # W*C = 128 -> fully lane-dense slabs.
    N, C, H, W = 2, 8, 16, 16
    x = jax.random.normal(kx, (N, C, H, W), jnp.float32)
    params = init_params(kp, C, C)

    out = jax.block_until_ready(basic_block_forward(x, params))
    ref = jax.block_until_ready(basic_block_ref(x, params))

    np.testing.assert_allclose(np.asarray(out), np.asarray(ref),
                               rtol=5e-3, atol=5e-3)
    print("KERNEL_OK")
</pallas_src>

<mosaic_0001>
module attributes {stable_mosaic.version = 11 : i64} {
  func.func @kernel(%arg0: memref<32x128xf32, #tpu.memory_space<vmem>>, %arg1: memref<3x128x128xbf16, #tpu.memory_space<vmem>>, %arg2: memref<1x128xf32, #tpu.memory_space<vmem>>, %arg3: memref<1x128xf32, #tpu.memory_space<vmem>>, %arg4: memref<3x128x128xbf16, #tpu.memory_space<vmem>>, %arg5: memref<1x128xf32, #tpu.memory_space<vmem>>, %arg6: memref<1x128xf32, #tpu.memory_space<vmem>>, %arg7: memref<128x128xf32, #tpu.memory_space<vmem>>, %arg8: memref<32x128xf32, #tpu.memory_space<vmem>>) attributes {dimension_semantics = [], scalar_prefetch = 0 : i64, scratch_operands = 0 : i64, tpu.core_type = #tpu.core_type<tc>} {
    %c0 = arith.constant 0 : index
    %c0_0 = arith.constant 0 : index
    %0 = vector.load %arg0[%c0, %c0_0] : memref<32x128xf32, #tpu.memory_space<vmem>>, vector<32x128xf32>
    %1 = tpu.iota {dimensions = array<i32: 0>} : vector<32x128xi32>
    %c16_i32 = arith.constant 16 : i32
    %c0_i32 = arith.constant 0 : i32
    %2 = arith.cmpi eq, %c16_i32, %c0_i32 : i32
    %c1_i32 = arith.constant 1 : i32
    %3 = arith.select %2, %c1_i32, %c16_i32 : i32
    %4 = vector.broadcast %3 : i32 to vector<32x128xi32>
    %5 = arith.remsi %1, %4 : vector<32x128xi32>
    %c0_i32_1 = arith.constant 0 : i32
    %6 = vector.broadcast %c0_i32_1 : i32 to vector<32x128xi32>
    %7 = arith.cmpi ne, %5, %6 : vector<32x128xi32>
    %c0_i32_2 = arith.constant 0 : i32
    %8 = vector.broadcast %c0_i32_2 : i32 to vector<32x128xi32>
    %9 = arith.cmpi slt, %5, %8 : vector<32x128xi32>
    %c0_i32_3 = arith.constant 0 : i32
    %10 = arith.cmpi slt, %3, %c0_i32_3 : i32
    %11 = vector.broadcast %10 : i1 to vector<32x128xi1>
    %12 = vector.broadcast %11 : vector<32x128xi1> to vector<32x128xi1>
    %13 = arith.xori %9, %12 : vector<32x128xi1>
    %14 = arith.andi %13, %7 : vector<32x128xi1>
    %15 = vector.broadcast %3 : i32 to vector<32x128xi32>
    %16 = arith.addi %5, %15 : vector<32x128xi32>
    %17 = arith.select %14, %16, %5 : vector<32x128xi1>, vector<32x128xi32>
    %c0_i32_4 = arith.constant 0 : i32
    %18 = vector.broadcast %c0_i32_4 : i32 to vector<32x128xi32>
    %19 = arith.cmpi eq, %17, %18 : vector<32x128xi32>
    %c15_i32 = arith.constant 15 : i32
    %20 = vector.broadcast %c15_i32 : i32 to vector<32x128xi32>
    %21 = arith.cmpi eq, %17, %20 : vector<32x128xi32>
    %c1_i32_5 = arith.constant 1 : i32
    %22 = tpu.dynamic_rotate %0 by %c1_i32_5 dim 0 : vector<32x128xf32>, i32 -> vector<32x128xf32>
    %cst = arith.constant 0.000000e+00 : f32
    %23 = vector.broadcast %cst : f32 to vector<32x128xf32>
    %24 = arith.select %19, %23, %22 : vector<32x128xi1>, vector<32x128xf32>
    %25 = arith.truncf %24 : vector<32x128xf32> to vector<32x128xbf16>
    %26 = arith.truncf %0 : vector<32x128xf32> to vector<32x128xbf16>
    %c31_i32 = arith.constant 31 : i32
    %27 = tpu.dynamic_rotate %0 by %c31_i32 dim 0 : vector<32x128xf32>, i32 -> vector<32x128xf32>
    %cst_6 = arith.constant 0.000000e+00 : f32
    %28 = vector.broadcast %cst_6 : f32 to vector<32x128xf32>
    %29 = arith.select %21, %28, %27 : vector<32x128xi1>, vector<32x128xf32>
    %30 = arith.truncf %29 : vector<32x128xf32> to vector<32x128xbf16>
    %c0_7 = arith.constant 0 : index
    %c0_8 = arith.constant 0 : index
    %c0_9 = arith.constant 0 : index
    %31 = vector.load %arg1[%c0_7, %c0_8, %c0_9] : memref<3x128x128xbf16, #tpu.memory_space<vmem>>, vector<1x128x128xbf16>
    %32 = vector.shape_cast %31 : vector<1x128x128xbf16> to vector<128x128xbf16>
    %cst_10 = arith.constant dense<0.000000e+00> : vector<32x128xf32>
    %33 = tpu.matmul %25, %32, %cst_10 {dimension_numbers = #tpu.dot_dimension_numbers<[1], [0], [0], [1], [0, 0, 1, 1], [], []>} : vector<32x128xbf16>, vector<128x128xbf16>, vector<32x128xf32> -> vector<32x128xf32>
    %c1 = arith.constant 1 : index
    %c0_11 = arith.constant 0 : index
    %c0_12 = arith.constant 0 : index
    %34 = vector.load %arg1[%c1, %c0_11, %c0_12] : memref<3x128x128xbf16, #tpu.memory_space<vmem>>, vector<1x128x128xbf16>
    %35 = vector.shape_cast %34 : vector<1x128x128xbf16> to vector<128x128xbf16>
    %cst_13 = arith.constant dense<0.000000e+00> : vector<32x128xf32>
    %36 = tpu.matmul %26, %35, %cst_13 {dimension_numbers = #tpu.dot_dimension_numbers<[1], [0], [0], [1], [0, 0, 1, 1], [], []>} : vector<32x128xbf16>, vector<128x128xbf16>, vector<32x128xf32> -> vector<32x128xf32>
    %37 = arith.addf %33, %36 : vector<32x128xf32>
    %c2 = arith.constant 2 : index
    %c0_14 = arith.constant 0 : index
    %c0_15 = arith.constant 0 : index
    %38 = vector.load %arg1[%c2, %c0_14, %c0_15] : memref<3x128x128xbf16, #tpu.memory_space<vmem>>, vector<1x128x128xbf16>
    %39 = vector.shape_cast %38 : vector<1x128x128xbf16> to vector<128x128xbf16>
    %cst_16 = arith.constant dense<0.000000e+00> : vector<32x128xf32>
    %40 = tpu.matmul %30, %39, %cst_16 {dimension_numbers = #tpu.dot_dimension_numbers<[1], [0], [0], [1], [0, 0, 1, 1], [], []>} : vector<32x128xbf16>, vector<128x128xbf16>, vector<32x128xf32> -> vector<32x128xf32>
    %41 = arith.addf %37, %40 : vector<32x128xf32>
    %cst_17 = arith.constant dense<0.000000e+00> : vector<128xf32>
    %42 = vector.multi_reduction <add>, %41, %cst_17 [0] : vector<32x128xf32> to vector<128xf32>
    %43 = vector.shape_cast %42 : vector<128xf32> to vector<1x128xf32>
    %44 = arith.mulf %41, %41 : vector<32x128xf32>
    %cst_18 = arith.constant dense<0.000000e+00> : vector<128xf32>
    %45 = vector.multi_reduction <add>, %44, %cst_18 [0] : vector<32x128xf32> to vector<128xf32>
    %46 = vector.shape_cast %45 : vector<128xf32> to vector<1x128xf32>
    %c0_19 = arith.constant 0 : index
    %c0_20 = arith.constant 0 : index
    %47 = vector.load %arg7[%c0_19, %c0_20] : memref<128x128xf32, #tpu.memory_space<vmem>>, vector<128x128xf32>
    %cst_21 = arith.constant dense<0.000000e+00> : vector<1x128xf32>
    %48 = tpu.matmul %43, %47, %cst_21 {dimension_numbers = #tpu.dot_dimension_numbers<[1], [0], [0], [1], [0, 0, 1, 1], [], []>} : vector<1x128xf32>, vector<128x128xf32>, vector<1x128xf32> -> vector<1x128xf32>
    %c0_22 = arith.constant 0 : index
    %c0_23 = arith.constant 0 : index
    %49 = vector.load %arg7[%c0_22, %c0_23] : memref<128x128xf32, #tpu.memory_space<vmem>>, vector<128x128xf32>
    %cst_24 = arith.constant dense<0.000000e+00> : vector<1x128xf32>
    %50 = tpu.matmul %46, %49, %cst_24 {dimension_numbers = #tpu.dot_dimension_numbers<[1], [0], [0], [1], [0, 0, 1, 1], [], []>} : vector<1x128xf32>, vector<128x128xf32>, vector<1x128xf32> -> vector<1x128xf32>
    %51 = arith.mulf %48, %48 : vector<1x128xf32>
    %52 = arith.subf %50, %51 : vector<1x128xf32>
    %cst_25 = arith.constant 9.99999974E-6 : f32
    %53 = vector.broadcast %cst_25 : f32 to vector<1x128xf32>
    %54 = arith.addf %52, %53 : vector<1x128xf32>
    %55 = math.rsqrt %54 : vector<1x128xf32>
    %56 = vector.broadcast %48 : vector<1x128xf32> to vector<32x128xf32>
    %57 = arith.subf %41, %56 : vector<32x128xf32>
    %c0_26 = arith.constant 0 : index
    %c0_27 = arith.constant 0 : index
    %58 = vector.load %arg2[%c0_26, %c0_27] : memref<1x128xf32, #tpu.memory_space<vmem>>, vector<1x128xf32>
    %59 = arith.mulf %55, %58 : vector<1x128xf32>
    %60 = vector.broadcast %59 : vector<1x128xf32> to vector<32x128xf32>
    %61 = arith.mulf %57, %60 : vector<32x128xf32>
    %c0_28 = arith.constant 0 : index
    %c0_29 = arith.constant 0 : index
    %62 = vector.load %arg3[%c0_28, %c0_29] : memref<1x128xf32, #tpu.memory_space<vmem>>, vector<1x128xf32>
    %63 = vector.broadcast %62 : vector<1x128xf32> to vector<32x128xf32>
    %64 = arith.addf %61, %63 : vector<32x128xf32>
    %cst_30 = arith.constant 0.000000e+00 : f32
    %65 = vector.broadcast %cst_30 : f32 to vector<32x128xf32>
    %66 = arith.maximumf %64, %65 : vector<32x128xf32>
    %c1_i32_31 = arith.constant 1 : i32
    %67 = tpu.dynamic_rotate %66 by %c1_i32_31 dim 0 : vector<32x128xf32>, i32 -> vector<32x128xf32>
    %cst_32 = arith.constant 0.000000e+00 : f32
    %68 = vector.broadcast %cst_32 : f32 to vector<32x128xf32>
    %69 = arith.select %19, %68, %67 : vector<32x128xi1>, vector<32x128xf32>
    %70 = arith.truncf %69 : vector<32x128xf32> to vector<32x128xbf16>
    %71 = arith.truncf %66 : vector<32x128xf32> to vector<32x128xbf16>
    %c31_i32_33 = arith.constant 31 : i32
    %72 = tpu.dynamic_rotate %66 by %c31_i32_33 dim 0 : vector<32x128xf32>, i32 -> vector<32x128xf32>
    %cst_34 = arith.constant 0.000000e+00 : f32
    %73 = vector.broadcast %cst_34 : f32 to vector<32x128xf32>
    %74 = arith.select %21, %73, %72 : vector<32x128xi1>, vector<32x128xf32>
    %75 = arith.truncf %74 : vector<32x128xf32> to vector<32x128xbf16>
    %c0_35 = arith.constant 0 : index
    %c0_36 = arith.constant 0 : index
    %c0_37 = arith.constant 0 : index
    %76 = vector.load %arg4[%c0_35, %c0_36, %c0_37] : memref<3x128x128xbf16, #tpu.memory_space<vmem>>, vector<1x128x128xbf16>
    %77 = vector.shape_cast %76 : vector<1x128x128xbf16> to vector<128x128xbf16>
    %cst_38 = arith.constant dense<0.000000e+00> : vector<32x128xf32>
    %78 = tpu.matmul %70, %77, %cst_38 {dimension_numbers = #tpu.dot_dimension_numbers<[1], [0], [0], [1], [0, 0, 1, 1], [], []>} : vector<32x128xbf16>, vector<128x128xbf16>, vector<32x128xf32> -> vector<32x128xf32>
    %c1_39 = arith.constant 1 : index
    %c0_40 = arith.constant 0 : index
    %c0_41 = arith.constant 0 : index
    %79 = vector.load %arg4[%c1_39, %c0_40, %c0_41] : memref<3x128x128xbf16, #tpu.memory_space<vmem>>, vector<1x128x128xbf16>
    %80 = vector.shape_cast %79 : vector<1x128x128xbf16> to vector<128x128xbf16>
    %cst_42 = arith.constant dense<0.000000e+00> : vector<32x128xf32>
    %81 = tpu.matmul %71, %80, %cst_42 {dimension_numbers = #tpu.dot_dimension_numbers<[1], [0], [0], [1], [0, 0, 1, 1], [], []>} : vector<32x128xbf16>, vector<128x128xbf16>, vector<32x128xf32> -> vector<32x128xf32>
    %82 = arith.addf %78, %81 : vector<32x128xf32>
    %c2_43 = arith.constant 2 : index
    %c0_44 = arith.constant 0 : index
    %c0_45 = arith.constant 0 : index
    %83 = vector.load %arg4[%c2_43, %c0_44, %c0_45] : memref<3x128x128xbf16, #tpu.memory_space<vmem>>, vector<1x128x128xbf16>
    %84 = vector.shape_cast %83 : vector<1x128x128xbf16> to vector<128x128xbf16>
    %cst_46 = arith.constant dense<0.000000e+00> : vector<32x128xf32>
    %85 = tpu.matmul %75, %84, %cst_46 {dimension_numbers = #tpu.dot_dimension_numbers<[1], [0], [0], [1], [0, 0, 1, 1], [], []>} : vector<32x128xbf16>, vector<128x128xbf16>, vector<32x128xf32> -> vector<32x128xf32>
    %86 = arith.addf %82, %85 : vector<32x128xf32>
    %cst_47 = arith.constant dense<0.000000e+00> : vector<128xf32>
    %87 = vector.multi_reduction <add>, %86, %cst_47 [0] : vector<32x128xf32> to vector<128xf32>
    %88 = vector.shape_cast %87 : vector<128xf32> to vector<1x128xf32>
    %89 = arith.mulf %86, %86 : vector<32x128xf32>
    %cst_48 = arith.constant dense<0.000000e+00> : vector<128xf32>
    %90 = vector.multi_reduction <add>, %89, %cst_48 [0] : vector<32x128xf32> to vector<128xf32>
    %91 = vector.shape_cast %90 : vector<128xf32> to vector<1x128xf32>
    %c0_49 = arith.constant 0 : index
    %c0_50 = arith.constant 0 : index
    %92 = vector.load %arg7[%c0_49, %c0_50] : memref<128x128xf32, #tpu.memory_space<vmem>>, vector<128x128xf32>
    %cst_51 = arith.constant dense<0.000000e+00> : vector<1x128xf32>
    %93 = tpu.matmul %88, %92, %cst_51 {dimension_numbers = #tpu.dot_dimension_numbers<[1], [0], [0], [1], [0, 0, 1, 1], [], []>} : vector<1x128xf32>, vector<128x128xf32>, vector<1x128xf32> -> vector<1x128xf32>
    %c0_52 = arith.constant 0 : index
    %c0_53 = arith.constant 0 : index
    %94 = vector.load %arg7[%c0_52, %c0_53] : memref<128x128xf32, #tpu.memory_space<vmem>>, vector<128x128xf32>
    %cst_54 = arith.constant dense<0.000000e+00> : vector<1x128xf32>
    %95 = tpu.matmul %91, %94, %cst_54 {dimension_numbers = #tpu.dot_dimension_numbers<[1], [0], [0], [1], [0, 0, 1, 1], [], []>} : vector<1x128xf32>, vector<128x128xf32>, vector<1x128xf32> -> vector<1x128xf32>
    %96 = arith.mulf %93, %93 : vector<1x128xf32>
    %97 = arith.subf %95, %96 : vector<1x128xf32>
    %cst_55 = arith.constant 9.99999974E-6 : f32
    %98 = vector.broadcast %cst_55 : f32 to vector<1x128xf32>
    %99 = arith.addf %97, %98 : vector<1x128xf32>
    %100 = math.rsqrt %99 : vector<1x128xf32>
    %101 = vector.broadcast %93 : vector<1x128xf32> to vector<32x128xf32>
    %102 = arith.subf %86, %101 : vector<32x128xf32>
    %c0_56 = arith.constant 0 : index
    %c0_57 = arith.constant 0 : index
    %103 = vector.load %arg5[%c0_56, %c0_57] : memref<1x128xf32, #tpu.memory_space<vmem>>, vector<1x128xf32>
    %104 = arith.mulf %100, %103 : vector<1x128xf32>
    %105 = vector.broadcast %104 : vector<1x128xf32> to vector<32x128xf32>
    %106 = arith.mulf %102, %105 : vector<32x128xf32>
    %c0_58 = arith.constant 0 : index
    %c0_59 = arith.constant 0 : index
    %107 = vector.load %arg6[%c0_58, %c0_59] : memref<1x128xf32, #tpu.memory_space<vmem>>, vector<1x128xf32>
    %108 = vector.broadcast %107 : vector<1x128xf32> to vector<32x128xf32>
    %109 = arith.addf %106, %108 : vector<32x128xf32>
    %110 = arith.addf %109, %0 : vector<32x128xf32>
    %cst_60 = arith.constant 0.000000e+00 : f32
    %111 = vector.broadcast %cst_60 : f32 to vector<32x128xf32>
    %112 = arith.maximumf %110, %111 : vector<32x128xf32>
    %c0_61 = arith.constant 0 : index
    %c0_62 = arith.constant 0 : index
    %113 = vector.load %arg8[%c0_61, %c0_62] : memref<32x128xf32, #tpu.memory_space<vmem>>, vector<32x128xf32>
    tpu.vector_store %arg8[%c0_61, %c0_62], %112 {strides = array<i32>} : memref<32x128xf32, #tpu.memory_space<vmem>>, vector<32x128xf32>,
    return
  }
}

</mosaic_0001>

<llo_original>
// kernel: tpu_custom_call.1
$region0: #{tpu_custom_call.1}
  #allocation0 [shape = 'u32[]', space=smem, size = 0x4, offset = 0x4, fixed_abs, tag = 'smem constant byte address 0x4 - core index']
  #allocation1 [shape = 'u32[144,128]{1,0:T(1,128)}', space=vmem, size = 0x12000, scoped, tag = 'internal scratch']
  %s0 = inlined_call_operand.hbm [shape: f32[32,128], index: 0, kind: input, shape index: {}]
  %s1 = inlined_call_operand.hbm [shape: bf16[3,128,128], index: 1, kind: input, shape index: {}]
  %s2 = inlined_call_operand.vmem [shape: f32[1,128], index: 2, kind: input, shape index: {}]
  %s3 = inlined_call_operand.vmem [shape: f32[1,128], index: 3, kind: input, shape index: {}]
  %s4 = inlined_call_operand.hbm [shape: bf16[3,128,128], index: 4, kind: input, shape index: {}]
  %s5 = inlined_call_operand.vmem [shape: f32[1,128], index: 5, kind: input, shape index: {}]
  %s6 = inlined_call_operand.vmem [shape: f32[1,128], index: 6, kind: input, shape index: {}]
  %s7 = inlined_call_operand.hbm [shape: f32[128,128], index: 7, kind: input, shape index: {}]
  %s8 = inlined_call_operand.hbm [shape: f32[32,128], index: 8, kind: output, shape index: {}]
  %s9 = sld [smem:[#allocation0]]
  $region58: #{tpu_custom_call.1} parent=0
    _
  %s11 = ssub.s32 1, %s9
  %s12 = scalar_select 0, %s11, %s9
  $region1: #{tpu_custom_call.1} parent=0
    #allocation2 [shape = 'u8[16384]{0}', space=vmem, size = 0x4000, scoped, tag = 'input window, operand 0, single buffered']
    #allocation3 [shape = 's32[1]{0}', space=sflag, size = 0x4, scoped, tag = 'scoped memory for tpu_custom_call.1']
    #allocation4 [shape = 's32[1]{0}', space=sflag, size = 0x4, scoped, tag = 'scoped memory for tpu_custom_call.1']
    #allocation5 [shape = 'u8[98304]{0}', space=vmem, size = 0x18000, scoped, tag = 'input window, operand 1, single buffered']
    #allocation6 [shape = 's32[1]{0}', space=sflag, size = 0x4, scoped, tag = 'scoped memory for tpu_custom_call.1']
    #allocation7 [shape = 'u8[98304]{0}', space=vmem, size = 0x18000, scoped, tag = 'input window, operand 4, single buffered']
    #allocation8 [shape = 'u8[65536]{0}', space=vmem, size = 0x10000, scoped, tag = 'input window, operand 7, single buffered']
    #allocation9 [shape = 's32[1]{0}', space=sflag, size = 0x4, scoped, tag = 'scoped memory for tpu_custom_call.1']
    #allocation10 [shape = 'u8[16384]{0}', space=vmem, size = 0x4000, scoped, tag = 'output window, operand 0, single buffered']
    %13 = vsyncpa [#allocation3], 0
    %14 = vsyncpa [#allocation6], 0
    %15 = vsyncpa [#allocation9], 0
    %16 = vsyncpa [#allocation4], 0
    // Predicated region
    $region2: #{tpu_custom_call.1} parent=1 // pred_check
      _
    $region3: #{tpu_custom_call.1} parent=1 // pred_check_branch
      %18 = sbr.rel (0) target = $region5
    $region4: #{tpu_custom_call.1} parent=1 // pred_region
      %s20 = ssub.s32 512, 512
      %21 = vsyncadd [#allocation3], %s20
      %s22 = sshll.u32 [#allocation2], 4
      %s23 = int_to_ptr.vmem [resolvable:$true] %s22
      %28 = dma.hbm_to_vmem [thread:$0]  %s0, 512, %s23, [#allocation3], 128, 128, 8
    $region5: #{tpu_custom_call.1} parent=1 // pred_fallthru
      _
    // Predicated region
    $region6: #{tpu_custom_call.1} parent=1 // pred_check
      _
    $region7: #{tpu_custom_call.1} parent=1 // pred_check_branch
      %30 = sbr.rel (0) target = $region9
    $region8: #{tpu_custom_call.1} parent=1 // pred_region
      %s32 = ssub.s32 3072, 3072
      %33 = vsyncadd [#allocation6], %s32
      %s34 = sshll.u32 [#allocation5], 4
      %s35 = int_to_ptr.vmem [resolvable:$true] %s34
      %40 = dma.hbm_to_vmem [thread:$0]  %s1, 3072, %s35, [#allocation6], 64, 64, 4
    $region9: #{tpu_custom_call.1} parent=1 // pred_fallthru
      _
    // Predicated region
    $region10: #{tpu_custom_call.1} parent=1 // pred_check
      _
    $region11: #{tpu_custom_call.1} parent=1 // pred_check_branch
      %42 = sbr.rel (0) target = $region13
    $region12: #{tpu_custom_call.1} parent=1 // pred_region
      _
    $region13: #{tpu_custom_call.1} parent=1 // pred_fallthru
      _
    // Predicated region
    $region14: #{tpu_custom_call.1} parent=1 // pred_check
      _
    $region15: #{tpu_custom_call.1} parent=1 // pred_check_branch
      %44 = sbr.rel (0) target = $region17
    $region16: #{tpu_custom_call.1} parent=1 // pred_region
      _
    $region17: #{tpu_custom_call.1} parent=1 // pred_fallthru
      _
    // Predicated region
    $region18: #{tpu_custom_call.1} parent=1 // pred_check
      _
    $region19: #{tpu_custom_call.1} parent=1 // pred_check_branch
      %46 = sbr.rel (0) target = $region21
    $region20: #{tpu_custom_call.1} parent=1 // pred_region
      %s48 = ssub.s32 3072, 3072
      %49 = vsyncadd [#allocation6], %s48
      %s50 = sshll.u32 [#allocation7], 4
      %s51 = int_to_ptr.vmem [resolvable:$true] %s50
      %56 = dma.hbm_to_vmem [thread:$0]  %s4, 3072, %s51, [#allocation6], 64, 64, 4
    $region21: #{tpu_custom_call.1} parent=1 // pred_fallthru
      _
    // Predicated region
    $region22: #{tpu_custom_call.1} parent=1 // pred_check
      _
    $region23: #{tpu_custom_call.1} parent=1 // pred_check_branch
      %58 = sbr.rel (0) target = $region25
    $region24: #{tpu_custom_call.1} parent=1 // pred_region
      _
    $region25: #{tpu_custom_call.1} parent=1 // pred_fallthru
      _
    // Predicated region
    $region26: #{tpu_custom_call.1} parent=1 // pred_check
      _
    $region27: #{tpu_custom_call.1} parent=1 // pred_check_branch
      %60 = sbr.rel (0) target = $region29
    $region28: #{tpu_custom_call.1} parent=1 // pred_region
      _
    $region29: #{tpu_custom_call.1} parent=1 // pred_fallthru
      _
    // Predicated region
    $region30: #{tpu_custom_call.1} parent=1 // pred_check
      _
    $region31: #{tpu_custom_call.1} parent=1 // pred_check_branch
      %62 = sbr.rel (0) target = $region33
    $region32: #{tpu_custom_call.1} parent=1 // pred_region
      %s64 = ssub.s32 2048, 2048
      %65 = vsyncadd [#allocation9], %s64
      %s66 = sshll.u32 [#allocation8], 4
      %s67 = int_to_ptr.vmem [resolvable:$true] %s66
      %72 = dma.hbm_to_vmem [thread:$0]  %s7, 2048, %s67, [#allocation9], 128, 128, 8
    $region33: #{tpu_custom_call.1} parent=1 // pred_fallthru
      _
    // Predicated region
    $region34: #{tpu_custom_call.1} parent=1 // pred_check
      _
    $region35: #{tpu_custom_call.1} parent=1 // pred_check_branch
      %74 = sbr.rel (0) target = $region37
    $region36: #{tpu_custom_call.1} parent=1 // pred_region
      %75 = dma.done [#allocation3], 512
    $region37: #{tpu_custom_call.1} parent=1 // pred_fallthru
      _
    // Predicated region
    $region38: #{tpu_custom_call.1} parent=1 // pred_check
      _
    $region39: #{tpu_custom_call.1} parent=1 // pred_check_branch
      %77 = sbr.rel (0) target = $region41
    $region40: #{tpu_custom_call.1} parent=1 // pred_region
      %78 = dma.done [#allocation6], 3072
    $region41: #{tpu_custom_call.1} parent=1 // pred_fallthru
      _
    // Predicated region
    $region42: #{tpu_custom_call.1} parent=1 // pred_check
      _
    $region43: #{tpu_custom_call.1} parent=1 // pred_check_branch
      %80 = sbr.rel (0) target = $region45
    $region44: #{tpu_custom_call.1} parent=1 // pred_region
      %81 = dma.done [#allocation6], 3072
    $region45: #{tpu_custom_call.1} parent=1 // pred_fallthru
      _
    // Predicated region
    $region46: #{tpu_custom_call.1} parent=1 // pred_check
      _
    $region47: #{tpu_custom_call.1} parent=1 // pred_check_branch
      %83 = sbr.rel (0) target = $region49
    $region48: #{tpu_custom_call.1} parent=1 // pred_region
      %84 = dma.done [#allocation9], 2048
    $region49: #{tpu_custom_call.1} parent=1 // pred_fallthru
      _
    %v86 = vld [vmem:[#allocation2] sm:$0xff]
    %v87 = vld [vmem:[#allocation2 + $0x8] sm:$0xff]
    %v88 = vld [vmem:[#allocation2 + $0x10] sm:$0xff]
    %v89 = vld [vmem:[#allocation2 + $0x18] sm:$0xff]
    %v90 = vlaneseq
    %v91 = vshrl.u32 %v90, 7
    %v92 = vadd.s32 %v91, 8
    %v93 = vadd.s32 %v91, 16
    %v94 = vadd.s32 %v91, 24
    %vm95 = vcmp.lt.s32.totalorder %v91, 0
    %v96 = vsub.s32 0, %v91
    %v97 = vsel %vm95, %v96, %v91
    %v98 = vshrl.u32 %v97, 4
    %v99 = vand.u32 %v97, 15
    %v100 = vsub.s32 0, %v99
    %v101 = vsel %vm95, %v100, %v99
    %vm102 = vcmp.lt.s32.totalorder %v92, 0
    %v103 = vsub.s32 0, %v92
    %v104 = vsel %vm102, %v103, %v92
    %v105 = vshrl.u32 %v104, 4
    %v106 = vand.u32 %v104, 15
    %v107 = vsub.s32 0, %v106
    %v108 = vsel %vm102, %v107, %v106
    %vm109 = vcmp.lt.s32.totalorder %v93, 0
    %v110 = vsub.s32 0, %v93
    %v111 = vsel %vm109, %v110, %v93
    %v112 = vshrl.u32 %v111, 4
    %v113 = vand.u32 %v111, 15
    %v114 = vsub.s32 0, %v113
    %v115 = vsel %vm109, %v114, %v113
    %vm116 = vcmp.lt.s32.totalorder %v94, 0
    %v117 = vsub.s32 0, %v94
    %v118 = vsel %vm116, %v117, %v94
    %v119 = vshrl.u32 %v118, 4
    %v120 = vand.u32 %v118, 15
    %v121 = vsub.s32 0, %v120
    %v122 = vsel %vm116, %v121, %v120
    %vm123 = vcmp.ne.s32.totalorder %v101, 0
    %vm124 = vcmp.ne.s32.totalorder %v108, 0
    %vm125 = vcmp.ne.s32.totalorder %v115, 0
    %vm126 = vcmp.ne.s32.totalorder %v122, 0
    %vm127 = vcmp.lt.s32.totalorder %v101, 0
    %vm128 = vcmp.lt.s32.totalorder %v108, 0
    %vm129 = vcmp.lt.s32.totalorder %v115, 0
    %vm130 = vcmp.lt.s32.totalorder %v122, 0
    %vm131 = vmand %vm127, %vm123
    %vm132 = vmand %vm128, %vm124
    %vm133 = vmand %vm129, %vm125
    %vm134 = vmand %vm130, %vm126
    %v135 = vadd.s32 %v101, 16
    %v136 = vadd.s32 %v108, 16
    %v137 = vadd.s32 %v115, 16
    %v138 = vadd.s32 %v122, 16
    %v139 = vsel %vm131, %v135, %v101
    %v140 = vsel %vm132, %v136, %v108
    %v141 = vsel %vm133, %v137, %v115
    %v142 = vsel %vm134, %v138, %v122
    %vm143 = vcmp.eq.s32.totalorder %v139, 0
    %vm144 = vcmp.eq.s32.totalorder %v140, 0
    %vm145 = vcmp.eq.s32.totalorder %v141, 0
    %vm146 = vcmp.eq.s32.totalorder %v142, 0
    %vm147 = vcmp.eq.s32.totalorder %v139, 15
    %vm148 = vcmp.eq.s32.totalorder %v140, 15
    %vm149 = vcmp.eq.s32.totalorder %v141, 15
    %vm150 = vcmp.eq.s32.totalorder %v142, 15
    %v151 = vrot.slane %v86, 7
    %v152 = vrot.slane %v87, 7
    %v153 = vrot.slane %v88, 7
    %v154 = vrot.slane %v89, 7
    %vm155 = vcmp.lt.s32.totalorder %v91, 1
    %v156 = vsel %vm155, %v153, %v154
    %v157 = vsel %vm155, %v152, %v153
    %v158 = vsel %vm155, %v151, %v152
    %v159 = vsel %vm155, %v154, %v151
    %v160 = vsel %vm143, 0.0, %v159
    %v161 = vsel %vm144, 0.0, %v158
    %v162 = vsel %vm145, 0.0, %v157
    %v163 = vsel %vm146, 0.0, %v156
    %v164 = vpack.c.bf16 %v161, %v160
    %v165 = vpack.c.bf16 %v163, %v162
    %v166 = vpack.c.bf16 %v87, %v86
    %v167 = vpack.c.bf16 %v89, %v88
    %v168 = vrot.slane %v86, 1
    %v169 = vrot.slane %v87, 1
    %v170 = vrot.slane %v88, 1
    %v171 = vrot.slane %v89, 1
    %vm172 = vcmp.lt.s32.totalorder %v91, 7
    %v173 = vsel %vm172, %v170, %v171
    %v174 = vsel %vm172, %v169, %v170
    %v175 = vsel %vm172, %v168, %v169
    %v176 = vsel %vm172, %v171, %v168
    %v177 = vsel %vm147, 0.0, %v175
    %v178 = vsel %vm148, 0.0, %v174
    %v179 = vsel %vm149, 0.0, %v173
    %v180 = vsel %vm150, 0.0, %v176
    %v181 = vpack.c.bf16 %v178, %v177
    %v182 = vpack.c.bf16 %v180, %v179
    %v183 = vld [vmem:[#allocation5] sm:$0xf]
    %v184 = vld [vmem:[#allocation5 + $0x4] sm:$0xf]
    %v185 = vld [vmem:[#allocation5 + $0x8] sm:$0xf]
    %v186 = vld [vmem:[#allocation5 + $0xc] sm:$0xf]
    %v187 = vld [vmem:[#allocation5 + $0x10] sm:$0xf]
    %v188 = vld [vmem:[#allocation5 + $0x14] sm:$0xf]
    %v189 = vld [vmem:[#allocation5 + $0x18] sm:$0xf]
    %v190 = vld [vmem:[#allocation5 + $0x1c] sm:$0xf]
    %v191 = vld [vmem:[#allocation5 + $0x20] sm:$0xf]
    %v192 = vld [vmem:[#allocation5 + $0x24] sm:$0xf]
    %v193 = vld [vmem:[#allocation5 + $0x28] sm:$0xf]
    %v194 = vld [vmem:[#allocation5 + $0x2c] sm:$0xf]
    %v195 = vld [vmem:[#allocation5 + $0x30] sm:$0xf]
    %v196 = vld [vmem:[#allocation5 + $0x34] sm:$0xf]
    %v197 = vld [vmem:[#allocation5 + $0x38] sm:$0xf]
    %v198 = vld [vmem:[#allocation5 + $0x3c] sm:$0xf]
    %s199 = scalar_lea.vmem [#allocation5], 64
    %v200 = vld [vmem:[%s199] sm:$0xf]
    %v201 = vld [vmem:[%s199 + $0x4] sm:$0xf]
    %v202 = vld [vmem:[%s199 + $0x8] sm:$0xf]
    %v203 = vld [vmem:[%s199 + $0xc] sm:$0xf]
    %v204 = vld [vmem:[%s199 + $0x10] sm:$0xf]
    %v205 = vld [vmem:[%s199 + $0x14] sm:$0xf]
    %v206 = vld [vmem:[%s199 + $0x18] sm:$0xf]
    %v207 = vld [vmem:[%s199 + $0x1c] sm:$0xf]
    %v208 = vld [vmem:[%s199 + $0x20] sm:$0xf]
    %v209 = vld [vmem:[%s199 + $0x24] sm:$0xf]
    %v210 = vld [vmem:[%s199 + $0x28] sm:$0xf]
    %v211 = vld [vmem:[%s199 + $0x2c] sm:$0xf]
    %v212 = vld [vmem:[%s199 + $0x30] sm:$0xf]
    %v213 = vld [vmem:[%s199 + $0x34] sm:$0xf]
    %v214 = vld [vmem:[%s199 + $0x38] sm:$0xf]
    %v215 = vld [vmem:[%s199 + $0x3c] sm:$0xf]
    %v232 = vunpack.c.l.b16 %v200
    %v233 = vunpack.c.l.b16 %v201
    %v234 = vunpack.c.l.b16 %v202
    %v235 = vunpack.c.l.b16 %v203
    %v236 = vunpack.c.l.b16 %v204
    %v237 = vunpack.c.l.b16 %v205
    %v238 = vunpack.c.l.b16 %v206
    %v239 = vunpack.c.l.b16 %v207
    %v240 = vunpack.c.l.b16 %v208
    %v241 = vunpack.c.l.b16 %v209
    %v242 = vunpack.c.l.b16 %v210
    %v243 = vunpack.c.l.b16 %v211
    %v244 = vunpack.c.l.b16 %v212
    %v245 = vunpack.c.l.b16 %v213
    %v246 = vunpack.c.l.b16 %v214
    %v247 = vunpack.c.l.b16 %v215
    %v248 = vpack.c.b16 %v233, %v232
    %v249 = vpack.c.b16 %v235, %v234
    %v250 = vpack.c.b16 %v237, %v236
    %v251 = vpack.c.b16 %v239, %v238
    %v252 = vpack.c.b16 %v241, %v240
    %v253 = vpack.c.b16 %v243, %v242
    %v254 = vpack.c.b16 %v245, %v244
    %v255 = vpack.c.b16 %v247, %v246
    %264 = vmatprep.subr.bf16.mxu0 0
    %265 = vmatpush1.bf16.msra.mxu0 %v248
    %266 = vmatprep.subr.bf16.mxu0 0
    %267 = vmatpush1.bf16.msra.mxu0 %v249
    %268 = vmatprep.subr.bf16.mxu0 0
    %269 = vmatpush1.bf16.msra.mxu0 %v250
    %270 = vmatprep.subr.bf16.mxu0 0
    %271 = vmatpush1.bf16.msra.mxu0 %v251
    %272 = vmatprep.subr.bf16.mxu0 0
    %273 = vmatpush1.bf16.msra.mxu0 %v252
    %274 = vmatprep.subr.bf16.mxu0 0
    %275 = vmatpush1.bf16.msra.mxu0 %v253
    %276 = vmatprep.subr.bf16.mxu0 0
    %277 = vmatpush1.bf16.msra.mxu0 %v254
    %278 = vmatprep.subr.bf16.mxu0 0
    %279 = vmatpush1.bf16.msra.mxu0 %v255
    %280 = vmatprep.subr.bf16.mxu0 0
    %281 = vmatpush1.bf16.msra.mxu0 0
    %282 = vmatprep.subr.bf16.mxu0 0
    %283 = vmatpush1.bf16.msra.mxu0 0
    %284 = vmatprep.subr.bf16.mxu0 0
    %285 = vmatpush1.bf16.msra.mxu0 0
    %286 = vmatprep.subr.bf16.mxu0 0
    %287 = vmatpush1.bf16.msra.mxu0 0
    %288 = vmatprep.subr.bf16.mxu0 0
    %289 = vmatpush1.bf16.msra.mxu0 0
    %290 = vmatprep.subr.bf16.mxu0 0
    %291 = vmatpush1.bf16.msra.mxu0 0
    %292 = vmatprep.subr.bf16.mxu0 0
    %293 = vmatpush1.bf16.msra.mxu0 0
    %294 = vmatprep.subr.bf16.mxu0 0
    %295 = vmatpush1.bf16.msra.mxu0 0
    %296 = vmatprep.mubr.bf16.mxu0 0
    %297 = vmatmul.mubr.bf16.gmra.mrb[0].mxu0 %v166
    %v298 = vpop.f32.mrb[0].mxu0
    %v299 = vadd.f32 0.0, %v298
    %v300 = vpop.f32.mrb[0].mxu0
    %v301 = vpop.f32.mrb[0].mxu0
    %v302 = vadd.f32 0.0, %v301
    %v303 = vpop.f32.mrb[0].mxu0
    %304 = vmatprep.mubr.bf16.mxu0 0
    %305 = vmatmul.mubr.bf16.gmra.mrb[0].mxu0 %v167
    %v306 = vpop.f32.mrb[0].mxu0
    %v307 = vadd.f32 0.0, %v306
    %v308 = vpop.f32.mrb[0].mxu0
    %v309 = vpop.f32.mrb[0].mxu0
    %v310 = vadd.f32 0.0, %v309
    %v311 = vpop.f32.mrb[0].mxu0
    %312 = vdwg.mxu0
    %v329 = vunpack.c.l.b16 %v183
    %v330 = vunpack.c.l.b16 %v184
    %v331 = vunpack.c.l.b16 %v185
    %v332 = vunpack.c.l.b16 %v186
    %v333 = vunpack.c.l.b16 %v187
    %v334 = vunpack.c.l.b16 %v188
    %v335 = vunpack.c.l.b16 %v189
    %v336 = vunpack.c.l.b16 %v190
    %v337 = vunpack.c.l.b16 %v191
    %v338 = vunpack.c.l.b16 %v192
    %v339 = vunpack.c.l.b16 %v193
    %v340 = vunpack.c.l.b16 %v194
    %v341 = vunpack.c.l.b16 %v195
    %v342 = vunpack.c.l.b16 %v196
    %v343 = vunpack.c.l.b16 %v197
    %v344 = vunpack.c.l.b16 %v198
    %v345 = vpack.c.b16 %v330, %v329
    %v346 = vpack.c.b16 %v332, %v331
    %v347 = vpack.c.b16 %v334, %v333
    %v348 = vpack.c.b16 %v336, %v335
    %v349 = vpack.c.b16 %v338, %v337
    %v350 = vpack.c.b16 %v340, %v339
    %v351 = vpack.c.b16 %v342, %v341
    %v352 = vpack.c.b16 %v344, %v343
    %361 = vmatprep.subr.bf16.mxu0 0
    %362 = vmatpush1.bf16.msra.mxu0 %v345
    %363 = vmatprep.subr.bf16.mxu0 0
    %364 = vmatpush1.bf16.msra.mxu0 %v346
    %365 = vmatprep.subr.bf16.mxu0 0
    %366 = vmatpush1.bf16.msra.mxu0 %v347
    %367 = vmatprep.subr.bf16.mxu0 0
    %368 = vmatpush1.bf16.msra.mxu0 %v348
    %369 = vmatprep.subr.bf16.mxu0 0
    %370 = vmatpush1.bf16.msra.mxu0 %v349
    %371 = vmatprep.subr.bf16.mxu0 0
    %372 = vmatpush1.bf16.msra.mxu0 %v350
    %373 = vmatprep.subr.bf16.mxu0 0
    %374 = vmatpush1.bf16.msra.mxu0 %v351
    %375 = vmatprep.subr.bf16.mxu0 0
    %376 = vmatpush1.bf16.msra.mxu0 %v352
    %377 = vmatprep.subr.bf16.mxu0 0
    %378 = vmatpush1.bf16.msra.mxu0 0
    %379 = vmatprep.subr.bf16.mxu0 0
    %380 = vmatpush1.bf16.msra.mxu0 0
    %381 = vmatprep.subr.bf16.mxu0 0
    %382 = vmatpush1.bf16.msra.mxu0 0
    %383 = vmatprep.subr.bf16.mxu0 0
    %384 = vmatpush1.bf16.msra.mxu0 0
    %385 = vmatprep.subr.bf16.mxu0 0
    %386 = vmatpush1.bf16.msra.mxu0 0
    %387 = vmatprep.subr.bf16.mxu0 0
    %388 = vmatpush1.bf16.msra.mxu0 0
    %389 = vmatprep.subr.bf16.mxu0 0
    %390 = vmatpush1.bf16.msra.mxu0 0
    %391 = vmatprep.subr.bf16.mxu0 0
    %392 = vmatpush1.bf16.msra.mxu0 0
    %393 = vmatprep.mubr.bf16.mxu0 0
    %394 = vmatmul.mubr.bf16.gmra.mrb[0].mxu0 %v164
    %v395 = vpop.f32.mrb[0].mxu0
    %v396 = vadd.f32 %v299, %v395
    %v397 = vpop.f32.mrb[0].mxu0
    %v398 = vpop.f32.mrb[0].mxu0
    %v399 = vadd.f32 %v302, %v398
    %v400 = vpop.f32.mrb[0].mxu0
    %401 = vmatprep.mubr.bf16.mxu0 0
    %402 = vmatmul.mubr.bf16.gmra.mrb[0].mxu0 %v165
    %v403 = vpop.f32.mrb[0].mxu0
    %v404 = vadd.f32 %v307, %v403
    %v405 = vpop.f32.mrb[0].mxu0
    %v406 = vpop.f32.mrb[0].mxu0
    %v407 = vadd.f32 %v310, %v406
    %v408 = vpop.f32.mrb[0].mxu0
    %409 = vdwg.mxu0
    %s410 = scalar_lea.vmem [#allocation5], 128
    %v411 = vld [vmem:[%s410] sm:$0xf]
    %v412 = vld [vmem:[%s410 + $0x4] sm:$0xf]
    %v413 = vld [vmem:[%s410 + $0x8] sm:$0xf]
    %v414 = vld [vmem:[%s410 + $0xc] sm:$0xf]
    %v415 = vld [vmem:[%s410 + $0x10] sm:$0xf]
    %v416 = vld [vmem:[%s410 + $0x14] sm:$0xf]
    %v417 = vld [vmem:[%s410 + $0x18] sm:$0xf]
    %v418 = vld [vmem:[%s410 + $0x1c] sm:$0xf]
    %v419 = vld [vmem:[%s410 + $0x20] sm:$0xf]
    %v420 = vld [vmem:[%s410 + $0x24] sm:$0xf]
    %v421 = vld [vmem:[%s410 + $0x28] sm:$0xf]
    %v422 = vld [vmem:[%s410 + $0x2c] sm:$0xf]
    %v423 = vld [vmem:[%s410 + $0x30] sm:$0xf]
    %v424 = vld [vmem:[%s410 + $0x34] sm:$0xf]
    %v425 = vld [vmem:[%s410 + $0x38] sm:$0xf]
    %v426 = vld [vmem:[%s410 + $0x3c] sm:$0xf]
    %v443 = vunpack.c.l.b16 %v411
    %v444 = vunpack.c.l.b16 %v412
    %v445 = vunpack.c.l.b16 %v413
    %v446 = vunpack.c.l.b16 %v414
    %v447 = vunpack.c.l.b16 %v415
    %v448 = vunpack.c.l.b16 %v416
    %v449 = vunpack.c.l.b16 %v417
    %v450 = vunpack.c.l.b16 %v418
    %v451 = vunpack.c.l.b16 %v419
    %v452 = vunpack.c.l.b16 %v420
    %v453 = vunpack.c.l.b16 %v421
    %v454 = vunpack.c.l.b16 %v422
    %v455 = vunpack.c.l.b16 %v423
    %v456 = vunpack.c.l.b16 %v424
    %v457 = vunpack.c.l.b16 %v425
    %v458 = vunpack.c.l.b16 %v426
    %v459 = vpack.c.b16 %v444, %v443
    %v460 = vpack.c.b16 %v446, %v445
    %v461 = vpack.c.b16 %v448, %v447
    %v462 = vpack.c.b16 %v450, %v449
    %v463 = vpack.c.b16 %v452, %v451
    %v464 = vpack.c.b16 %v454, %v453
    %v465 = vpack.c.b16 %v456, %v455
    %v466 = vpack.c.b16 %v458, %v457
    %475 = vmatprep.subr.bf16.mxu0 0
    %476 = vmatpush1.bf16.msra.mxu0 %v459
    %477 = vmatprep.subr.bf16.mxu0 0
    %478 = vmatpush1.bf16.msra.mxu0 %v460
    %479 = vmatprep.subr.bf16.mxu0 0
    %480 = vmatpush1.bf16.msra.mxu0 %v461
    %481 = vmatprep.subr.bf16.mxu0 0
    %482 = vmatpush1.bf16.msra.mxu0 %v462
    %483 = vmatprep.subr.bf16.mxu0 0
    %484 = vmatpush1.bf16.msra.mxu0 %v463
    %485 = vmatprep.subr.bf16.mxu0 0
    %486 = vmatpush1.bf16.msra.mxu0 %v464
    %487 = vmatprep.subr.bf16.mxu0 0
    %488 = vmatpush1.bf16.msra.mxu0 %v465
    %489 = vmatprep.subr.bf16.mxu0 0
    %490 = vmatpush1.bf16.msra.mxu0 %v466
    %491 = vmatprep.subr.bf16.mxu0 0
    %492 = vmatpush1.bf16.msra.mxu0 0
    %493 = vmatprep.subr.bf16.mxu0 0
    %494 = vmatpush1.bf16.msra.mxu0 0
    %495 = vmatprep.subr.bf16.mxu0 0
    %496 = vmatpush1.bf16.msra.mxu0 0
    %497 = vmatprep.subr.bf16.mxu0 0
    %498 = vmatpush1.bf16.msra.mxu0 0
    %499 = vmatprep.subr.bf16.mxu0 0
    %500 = vmatpush1.bf16.msra.mxu0 0
    %501 = vmatprep.subr.bf16.mxu0 0
    %502 = vmatpush1.bf16.msra.mxu0 0
    %503 = vmatprep.subr.bf16.mxu0 0
    %504 = vmatpush1.bf16.msra.mxu0 0
    %505 = vmatprep.subr.bf16.mxu0 0
    %506 = vmatpush1.bf16.msra.mxu0 0
    %507 = vmatprep.mubr.bf16.mxu0 0
    %508 = vmatmul.mubr.bf16.gmra.mrb[0].mxu0 %v181
    %v509 = vpop.f32.mrb[0].mxu0
    %v510 = vadd.f32 0.0, %v509
    %v511 = vpop.f32.mrb[0].mxu0
    %v512 = vpop.f32.mrb[0].mxu0
    %v513 = vadd.f32 0.0, %v512
    %v514 = vpop.f32.mrb[0].mxu0
    %515 = vmatprep.mubr.bf16.mxu0 0
    %516 = vmatmul.mubr.bf16.gmra.mrb[0].mxu0 %v182
    %v517 = vpop.f32.mrb[0].mxu0
    %v518 = vadd.f32 0.0, %v517
    %v519 = vpop.f32.mrb[0].mxu0
    %v520 = vpop.f32.mrb[0].mxu0
    %v521 = vadd.f32 0.0, %v520
    %v522 = vpop.f32.mrb[0].mxu0
    %523 = vdwg.mxu0
    %v524 = vadd.f32 %v396, %v510
    %v525 = vadd.f32 %v399, %v513
    %v526 = vadd.f32 %v404, %v518
    %v527 = vadd.f32 %v407, %v521
    %v528 = vadd.f32 %v524, %v525
    %v529 = vadd.f32 %v528, %v526
    %v530 = vadd.f32 %v529, %v527
    %v531 = vrot.slane %v530, 4
    %v532 = vadd.f32 %v530, %v531
    %v533 = vrot.slane %v532, 2
    %v534 = vadd.f32 %v532, %v533
    %v535 = vrot.slane %v534, 1
    %v536 = vadd.f32 %v534, %v535
    %v537 = vmul.f32 %v524, %v524
    %v538 = vmul.f32 %v525, %v525
    %v539 = vmul.f32 %v526, %v526
    %v540 = vmul.f32 %v527, %v527
    %v541 = vadd.f32 %v537, %v538
    %v542 = vadd.f32 %v541, %v539
    %v543 = vadd.f32 %v542, %v540
    %v544 = vrot.slane %v543, 4
    %v545 = vadd.f32 %v543, %v544
    %v546 = vrot.slane %v545, 2
    %v547 = vadd.f32 %v545, %v546
    %v548 = vrot.slane %v547, 1
    %v549 = vadd.f32 %v547, %v548
    %v550 = vld [vmem:[#allocation8] sm:$0xff]
    %v551 = vld [vmem:[#allocation8 + $0x8] sm:$0xff]
    %v552 = vld [vmem:[#allocation8 + $0x10] sm:$0xff]
    %v553 = vld [vmem:[#allocation8 + $0x18] sm:$0xff]
    %v554 = vld [vmem:[#allocation8 + $0x20] sm:$0xff]
    %v555 = vld [vmem:[#allocation8 + $0x28] sm:$0xff]
    %v556 = vld [vmem:[#allocation8 + $0x30] sm:$0xff]
    %v557 = vld [vmem:[#allocation8 + $0x38] sm:$0xff]
    %v558 = vld [vmem:[#allocation8 + $0x40] sm:$0xff]
    %v559 = vld [vmem:[#allocation8 + $0x48] sm:$0xff]
    %v560 = vld [vmem:[#allocation8 + $0x50] sm:$0xff]
    %v561 = vld [vmem:[#allocation8 + $0x58] sm:$0xff]
    %v562 = vld [vmem:[#allocation8 + $0x60] sm:$0xff]
    %v563 = vld [vmem:[#allocation8 + $0x68] sm:$0xff]
    %v564 = vld [vmem:[#allocation8 + $0x70] sm:$0xff]
    %v565 = vld [vmem:[#allocation8 + $0x78] sm:$0xff]
    %566 = vmatprep.subr.mxu0 0.0
    %567 = vmatpush1.msra.mxu0 %v550
    %568 = vmatprep.subr.mxu0 0.0
    %569 = vmatpush1.msra.mxu0 %v551
    %570 = vmatprep.subr.mxu0 0.0
    %571 = vmatpush1.msra.mxu0 %v552
    %572 = vmatprep.subr.mxu0 0.0
    %573 = vmatpush1.msra.mxu0 %v553
    %574 = vmatprep.subr.mxu0 0.0
    %575 = vmatpush1.msra.mxu0 %v554
    %576 = vmatprep.subr.mxu0 0.0
    %577 = vmatpush1.msra.mxu0 %v555
    %578 = vmatprep.subr.mxu0 0.0
    %579 = vmatpush1.msra.mxu0 %v556
    %580 = vmatprep.subr.mxu0 0.0
    %581 = vmatpush1.msra.mxu0 %v557
    %582 = vmatprep.subr.mxu0 0.0
    %583 = vmatpush1.msra.mxu0 %v558
    %584 = vmatprep.subr.mxu0 0.0
    %585 = vmatpush1.msra.mxu0 %v559
    %586 = vmatprep.subr.mxu0 0.0
    %587 = vmatpush1.msra.mxu0 %v560
    %588 = vmatprep.subr.mxu0 0.0
    %589 = vmatpush1.msra.mxu0 %v561
    %590 = vmatprep.subr.mxu0 0.0
    %591 = vmatpush1.msra.mxu0 %v562
    %592 = vmatprep.subr.mxu0 0.0
    %593 = vmatpush1.msra.mxu0 %v563
    %594 = vmatprep.subr.mxu0 0.0
    %595 = vmatpush1.msra.mxu0 %v564
    %596 = vmatprep.subr.mxu0 0.0
    %597 = vmatpush1.msra.mxu0 %v565
    %598 = vmatprep.subr.mxu0 0.0
    %599 = vmatpush1.msra.mxu0 0.0
    %600 = vmatprep.subr.mxu0 0.0
    %601 = vmatpush1.msra.mxu0 0.0
    %602 = vmatprep.subr.mxu0 0.0
    %603 = vmatpush1.msra.mxu0 0.0
    %604 = vmatprep.subr.mxu0 0.0
    %605 = vmatpush1.msra.mxu0 0.0
    %606 = vmatprep.subr.mxu0 0.0
    %607 = vmatpush1.msra.mxu0 0.0
    %608 = vmatprep.subr.mxu0 0.0
    %609 = vmatpush1.msra.mxu0 0.0
    %610 = vmatprep.subr.mxu0 0.0
    %611 = vmatpush1.msra.mxu0 0.0
    %612 = vmatprep.subr.mxu0 0.0
    %613 = vmatpush1.msra.mxu0 0.0
    %614 = vmatprep.subr.mxu0 0.0
    %615 = vmatpush1.msra.mxu0 0.0
    %616 = vmatprep.subr.mxu0 0.0
    %617 = vmatpush1.msra.mxu0 0.0
    %618 = vmatprep.subr.mxu0 0.0
    %619 = vmatpush1.msra.mxu0 0.0
    %620 = vmatprep.subr.mxu0 0.0
    %621 = vmatpush1.msra.mxu0 0.0
    %622 = vmatprep.subr.mxu0 0.0
    %623 = vmatpush1.msra.mxu0 0.0
    %624 = vmatprep.subr.mxu0 0.0
    %625 = vmatpush1.msra.mxu0 0.0
    %626 = vmatprep.subr.mxu0 0.0
    %627 = vmatpush1.msra.mxu0 0.0
    %628 = vmatprep.subr.mxu0 0.0
    %629 = vmatpush1.msra.mxu0 0.0
    %630 = vmatprep.mubr.f32.mxu0 0.0
    %631 = vmatmul.mubr.f32.gmra.mrb[0].mxu0 %v536
    %v632 = vpop.f32.mrb[0].mxu0
    %v633 = vadd.f32 0.0, %v632
    %v634 = vpop.f32.mrb[0].mxu0
    %635 = vdwg.mxu0
    %636 = vmatprep.subr.mxu0 0.0
    %637 = vmatpush1.msra.mxu0 %v550
    %638 = vmatprep.subr.mxu0 0.0
    %639 = vmatpush1.msra.mxu0 %v551
    %640 = vmatprep.subr.mxu0 0.0
    %641 = vmatpush1.msra.mxu0 %v552
    %642 = vmatprep.subr.mxu0 0.0
    %643 = vmatpush1.msra.mxu0 %v553
    %644 = vmatprep.subr.mxu0 0.0
    %645 = vmatpush1.msra.mxu0 %v554
    %646 = vmatprep.subr.mxu0 0.0
    %647 = vmatpush1.msra.mxu0 %v555
    %648 = vmatprep.subr.mxu0 0.0
    %649 = vmatpush1.msra.mxu0 %v556
    %650 = vmatprep.subr.mxu0 0.0
    %651 = vmatpush1.msra.mxu0 %v557
    %652 = vmatprep.subr.mxu0 0.0
    %653 = vmatpush1.msra.mxu0 %v558
    %654 = vmatprep.subr.mxu0 0.0
    %655 = vmatpush1.msra.mxu0 %v559
    %656 = vmatprep.subr.mxu0 0.0
    %657 = vmatpush1.msra.mxu0 %v560
    %658 = vmatprep.subr.mxu0 0.0
    %659 = vmatpush1.msra.mxu0 %v561
    %660 = vmatprep.subr.mxu0 0.0
    %661 = vmatpush1.msra.mxu0 %v562
    %662 = vmatprep.subr.mxu0 0.0
    %663 = vmatpush1.msra.mxu0 %v563
    %664 = vmatprep.subr.mxu0 0.0
    %665 = vmatpush1.msra.mxu0 %v564
    %666 = vmatprep.subr.mxu0 0.0
    %667 = vmatpush1.msra.mxu0 %v565
    %668 = vmatprep.subr.mxu0 0.0
    %669 = vmatpush1.msra.mxu0 0.0
    %670 = vmatprep.subr.mxu0 0.0
    %671 = vmatpush1.msra.mxu0 0.0
    %672 = vmatprep.subr.mxu0 0.0
    %673 = vmatpush1.msra.mxu0 0.0
    %674 = vmatprep.subr.mxu0 0.0
    %675 = vmatpush1.msra.mxu0 0.0
    %676 = vmatprep.subr.mxu0 0.0
    %677 = vmatpush1.msra.mxu0 0.0
    %678 = vmatprep.subr.mxu0 0.0
    %679 = vmatpush1.msra.mxu0 0.0
    %680 = vmatprep.subr.mxu0 0.0
    %681 = vmatpush1.msra.mxu0 0.0
    %682 = vmatprep.subr.mxu0 0.0
    %683 = vmatpush1.msra.mxu0 0.0
    %684 = vmatprep.subr.mxu0 0.0
    %685 = vmatpush1.msra.mxu0 0.0
    %686 = vmatprep.subr.mxu0 0.0
    %687 = vmatpush1.msra.mxu0 0.0
    %688 = vmatprep.subr.mxu0 0.0
    %689 = vmatpush1.msra.mxu0 0.0
    %690 = vmatprep.subr.mxu0 0.0
    %691 = vmatpush1.msra.mxu0 0.0
    %692 = vmatprep.subr.mxu0 0.0
    %693 = vmatpush1.msra.mxu0 0.0
    %694 = vmatprep.subr.mxu0 0.0
    %695 = vmatpush1.msra.mxu0 0.0
    %696 = vmatprep.subr.mxu0 0.0
    %697 = vmatpush1.msra.mxu0 0.0
    %698 = vmatprep.subr.mxu0 0.0
    %699 = vmatpush1.msra.mxu0 0.0
    %700 = vmatprep.mubr.f32.mxu0 0.0
    %701 = vmatmul.mubr.f32.gmra.mrb[0].mxu0 %v549
    %v702 = vpop.f32.mrb[0].mxu0
    %v703 = vadd.f32 0.0, %v702
    %v704 = vpop.f32.mrb[0].mxu0
    %705 = vdwg.mxu0
    %v706 = vmul.f32 %v633, %v633
    %v707 = vsub.f32 %v703, %v706
    %v708 = vadd.f32 %v707, 1e-05
    %v709 = vrsqrt.pop %v708
    %v710 = vlaneseq
    %v711 = vshrl.u32 %v710, 7
    %v712 = vsub.s32 0, %v711
    %v713 = vrot.slane %v633, %v712
    %v714 = vsub.f32 %v524, %v713
    %v715 = vsub.f32 %v525, %v713
    %v716 = vsub.f32 %v526, %v713
    %v717 = vsub.f32 %v527, %v713
    %v718 = vld [vmem:[%s2] sm:$0x1]
    %v719 = vmul.f32 %v709, %v718
    %v720 = vlaneseq
    %v721 = vshrl.u32 %v720, 7
    %v722 = vsub.s32 0, %v721
    %v723 = vrot.slane %v719, %v722
    %v724 = vmul.f32 %v714, %v723
    %v725 = vmul.f32 %v715, %v723
    %v726 = vmul.f32 %v716, %v723
    %v727 = vmul.f32 %v717, %v723
    %v728 = vld [vmem:[%s3] sm:$0x1]
    %v730 = vlaneseq
    %v731 = vshrl.u32 %v730, 7
    %v732 = vsub.s32 0, %v731
    %v733 = vrot.slane %v728, %v732
    %v735 = vadd.f32 %v724, %v733
    %v736 = vadd.f32 %v725, %v733
    %v737 = vadd.f32 %v726, %v733
    %v738 = vadd.f32 %v727, %v733
    %v739 = vmax.f32 %v735, 0.0
    %v740 = vmax.f32 %v736, 0.0
    %v741 = vmax.f32 %v737, 0.0
    %v742 = vmax.f32 %v738, 0.0
    %v743 = vrot.slane %v739, 7
    %v744 = vrot.slane %v740, 7
    %v745 = vrot.slane %v741, 7
    %v746 = vrot.slane %v742, 7
    %v747 = vsel %vm155, %v745, %v746
    %v748 = vsel %vm155, %v744, %v745
    %v749 = vsel %vm155, %v743, %v744
    %v750 = vsel %vm155, %v746, %v743
    %v751 = vsel %vm143, 0.0, %v750
    %v752 = vsel %vm144, 0.0, %v749
    %v753 = vsel %vm145, 0.0, %v748
    %v754 = vsel %vm146, 0.0, %v747
    %v755 = vpack.c.bf16 %v752, %v751
    %v756 = vpack.c.bf16 %v754, %v753
    %v757 = vpack.c.bf16 %v740, %v739
    %v758 = vpack.c.bf16 %v742, %v741
    %v759 = vrot.slane %v739, 1
    %v760 = vrot.slane %v740, 1
    %v761 = vrot.slane %v741, 1
    %v762 = vrot.slane %v742, 1
    %v763 = vsel %vm172, %v761, %v762
    %v764 = vsel %vm172, %v760, %v761
    %v765 = vsel %vm172, %v759, %v760
    %v766 = vsel %vm172, %v762, %v759
    %v767 = vsel %vm147, 0.0, %v765
    %v768 = vsel %vm148, 0.0, %v764
    %v769 = vsel %vm149, 0.0, %v763
    %v770 = vsel %vm150, 0.0, %v766
    %v771 = vpack.c.bf16 %v768, %v767
    %v772 = vpack.c.bf16 %v770, %v769
    %v773 = vld [vmem:[#allocation7] sm:$0xf]
    %v774 = vld [vmem:[#allocation7 + $0x4] sm:$0xf]
    %v775 = vld [vmem:[#allocation7 + $0x8] sm:$0xf]
    %v776 = vld [vmem:[#allocation7 + $0xc] sm:$0xf]
    %v777 = vld [vmem:[#allocation7 + $0x10] sm:$0xf]
    %v778 = vld [vmem:[#allocation7 + $0x14] sm:$0xf]
    %v779 = vld [vmem:[#allocation7 + $0x18] sm:$0xf]
    %v780 = vld [vmem:[#allocation7 + $0x1c] sm:$0xf]
    %v781 = vld [vmem:[#allocation7 + $0x20] sm:$0xf]
    %v782 = vld [vmem:[#allocation7 + $0x24] sm:$0xf]
    %v783 = vld [vmem:[#allocation7 + $0x28] sm:$0xf]
    %v784 = vld [vmem:[#allocation7 + $0x2c] sm:$0xf]
    %v785 = vld [vmem:[#allocation7 + $0x30] sm:$0xf]
    %v786 = vld [vmem:[#allocation7 + $0x34] sm:$0xf]
    %v787 = vld [vmem:[#allocation7 + $0x38] sm:$0xf]
    %v788 = vld [vmem:[#allocation7 + $0x3c] sm:$0xf]
    %s789 = scalar_lea.vmem [#allocation7], 64
    %v790 = vld [vmem:[%s789] sm:$0xf]
    %v791 = vld [vmem:[%s789 + $0x4] sm:$0xf]
    %v792 = vld [vmem:[%s789 + $0x8] sm:$0xf]
    %v793 = vld [vmem:[%s789 + $0xc] sm:$0xf]
    %v794 = vld [vmem:[%s789 + $0x10] sm:$0xf]
    %v795 = vld [vmem:[%s789 + $0x14] sm:$0xf]
    %v796 = vld [vmem:[%s789 + $0x18] sm:$0xf]
    %v797 = vld [vmem:[%s789 + $0x1c] sm:$0xf]
    %v798 = vld [vmem:[%s789 + $0x20] sm:$0xf]
    %v799 = vld [vmem:[%s789 + $0x24] sm:$0xf]
    %v800 = vld [vmem:[%s789 + $0x28] sm:$0xf]
    %v801 = vld [vmem:[%s789 + $0x2c] sm:$0xf]
    %v802 = vld [vmem:[%s789 + $0x30] sm:$0xf]
    %v803 = vld [vmem:[%s789 + $0x34] sm:$0xf]
    %v804 = vld [vmem:[%s789 + $0x38] sm:$0xf]
    %v805 = vld [vmem:[%s789 + $0x3c] sm:$0xf]
    %v822 = vunpack.c.l.b16 %v790
    %v823 = vunpack.c.l.b16 %v791
    %v824 = vunpack.c.l.b16 %v792
    %v825 = vunpack.c.l.b16 %v793
    %v826 = vunpack.c.l.b16 %v794
    %v827 = vunpack.c.l.b16 %v795
    %v828 = vunpack.c.l.b16 %v796
    %v829 = vunpack.c.l.b16 %v797
    %v830 = vunpack.c.l.b16 %v798
    %v831 = vunpack.c.l.b16 %v799
    %v832 = vunpack.c.l.b16 %v800
    %v833 = vunpack.c.l.b16 %v801
    %v834 = vunpack.c.l.b16 %v802
    %v835 = vunpack.c.l.b16 %v803
    %v836 = vunpack.c.l.b16 %v804
    %v837 = vunpack.c.l.b16 %v805
    %v838 = vpack.c.b16 %v823, %v822
    %v839 = vpack.c.b16 %v825, %v824
    %v840 = vpack.c.b16 %v827, %v826
    %v841 = vpack.c.b16 %v829, %v828
    %v842 = vpack.c.b16 %v831, %v830
    %v843 = vpack.c.b16 %v833, %v832
    %v844 = vpack.c.b16 %v835, %v834
    %v845 = vpack.c.b16 %v837, %v836
    %854 = vmatprep.subr.bf16.mxu0 0
    %855 = vmatpush1.bf16.msra.mxu0 %v838
    %856 = vmatprep.subr.bf16.mxu0 0
    %857 = vmatpush1.bf16.msra.mxu0 %v839
    %858 = vmatprep.subr.bf16.mxu0 0
    %859 = vmatpush1.bf16.msra.mxu0 %v840
    %860 = vmatprep.subr.bf16.mxu0 0
    %861 = vmatpush1.bf16.msra.mxu0 %v841
    %862 = vmatprep.subr.bf16.mxu0 0
    %863 = vmatpush1.bf16.msra.mxu0 %v842
    %864 = vmatprep.subr.bf16.mxu0 0
    %865 = vmatpush1.bf16.msra.mxu0 %v843
    %866 = vmatprep.subr.bf16.mxu0 0
    %867 = vmatpush1.bf16.msra.mxu0 %v844
    %868 = vmatprep.subr.bf16.mxu0 0
    %869 = vmatpush1.bf16.msra.mxu0 %v845
    %870 = vmatprep.subr.bf16.mxu0 0
    %871 = vmatpush1.bf16.msra.mxu0 0
    %872 = vmatprep.subr.bf16.mxu0 0
    %873 = vmatpush1.bf16.msra.mxu0 0
    %874 = vmatprep.subr.bf16.mxu0 0
    %875 = vmatpush1.bf16.msra.mxu0 0
    %876 = vmatprep.subr.bf16.mxu0 0
    %877 = vmatpush1.bf16.msra.mxu0 0
    %878 = vmatprep.subr.bf16.mxu0 0
    %879 = vmatpush1.bf16.msra.mxu0 0
    %880 = vmatprep.subr.bf16.mxu0 0
    %881 = vmatpush1.bf16.msra.mxu0 0
    %882 = vmatprep.subr.bf16.mxu0 0
    %883 = vmatpush1.bf16.msra.mxu0 0
    %884 = vmatprep.subr.bf16.mxu0 0
    %885 = vmatpush1.bf16.msra.mxu0 0
    %886 = vmatprep.mubr.bf16.mxu0 0
    %887 = vmatmul.mubr.bf16.gmra.mrb[0].mxu0 %v757
    %v888 = vpop.f32.mrb[0].mxu0
    %v889 = vadd.f32 0.0, %v888
    %v890 = vpop.f32.mrb[0].mxu0
    %v891 = vpop.f32.mrb[0].mxu0
    %v892 = vadd.f32 0.0, %v891
    %v893 = vpop.f32.mrb[0].mxu0
    %894 = vmatprep.mubr.bf16.mxu0 0
    %895 = vmatmul.mubr.bf16.gmra.mrb[0].mxu0 %v758
    %v896 = vpop.f32.mrb[0].mxu0
    %v897 = vadd.f32 0.0, %v896
    %v898 = vpop.f32.mrb[0].mxu0
    %v899 = vpop.f32.mrb[0].mxu0
    %v900 = vadd.f32 0.0, %v899
    %v901 = vpop.f32.mrb[0].mxu0
    %902 = vdwg.mxu0
    %v919 = vunpack.c.l.b16 %v773
    %v920 = vunpack.c.l.b16 %v774
    %v921 = vunpack.c.l.b16 %v775
    %v922 = vunpack.c.l.b16 %v776
    %v923 = vunpack.c.l.b16 %v777
    %v924 = vunpack.c.l.b16 %v778
    %v925 = vunpack.c.l.b16 %v779
    %v926 = vunpack.c.l.b16 %v780
    %v927 = vunpack.c.l.b16 %v781
    %v928 = vunpack.c.l.b16 %v782
    %v929 = vunpack.c.l.b16 %v783
    %v930 = vunpack.c.l.b16 %v784
    %v931 = vunpack.c.l.b16 %v785
    %v932 = vunpack.c.l.b16 %v786
    %v933 = vunpack.c.l.b16 %v787
    %v934 = vunpack.c.l.b16 %v788
    %v935 = vpack.c.b16 %v920, %v919
    %v936 = vpack.c.b16 %v922, %v921
    %v937 = vpack.c.b16 %v924, %v923
    %v938 = vpack.c.b16 %v926, %v925
    %v939 = vpack.c.b16 %v928, %v927
    %v940 = vpack.c.b16 %v930, %v929
    %v941 = vpack.c.b16 %v932, %v931
    %v942 = vpack.c.b16 %v934, %v933
    %951 = vmatprep.subr.bf16.mxu0 0
    %952 = vmatpush1.bf16.msra.mxu0 %v935
    %953 = vmatprep.subr.bf16.mxu0 0
    %954 = vmatpush1.bf16.msra.mxu0 %v936
    %955 = vmatprep.subr.bf16.mxu0 0
    %956 = vmatpush1.bf16.msra.mxu0 %v937
    %957 = vmatprep.subr.bf16.mxu0 0
    %958 = vmatpush1.bf16.msra.mxu0 %v938
    %959 = vmatprep.subr.bf16.mxu0 0
    %960 = vmatpush1.bf16.msra.mxu0 %v939
    %961 = vmatprep.subr.bf16.mxu0 0
    %962 = vmatpush1.bf16.msra.mxu0 %v940
    %963 = vmatprep.subr.bf16.mxu0 0
    %964 = vmatpush1.bf16.msra.mxu0 %v941
    %965 = vmatprep.subr.bf16.mxu0 0
    %966 = vmatpush1.bf16.msra.mxu0 %v942
    %967 = vmatprep.subr.bf16.mxu0 0
    %968 = vmatpush1.bf16.msra.mxu0 0
    %969 = vmatprep.subr.bf16.mxu0 0
    %970 = vmatpush1.bf16.msra.mxu0 0
    %971 = vmatprep.subr.bf16.mxu0 0
    %972 = vmatpush1.bf16.msra.mxu0 0
    %973 = vmatprep.subr.bf16.mxu0 0
    %974 = vmatpush1.bf16.msra.mxu0 0
    %975 = vmatprep.subr.bf16.mxu0 0
    %976 = vmatpush1.bf16.msra.mxu0 0
    %977 = vmatprep.subr.bf16.mxu0 0
    %978 = vmatpush1.bf16.msra.mxu0 0
    %979 = vmatprep.subr.bf16.mxu0 0
    %980 = vmatpush1.bf16.msra.mxu0 0
    %981 = vmatprep.subr.bf16.mxu0 0
    %982 = vmatpush1.bf16.msra.mxu0 0
    %983 = vmatprep.mubr.bf16.mxu0 0
    %984 = vmatmul.mubr.bf16.gmra.mrb[0].mxu0 %v755
    %v985 = vpop.f32.mrb[0].mxu0
    %v986 = vadd.f32 %v889, %v985
    %v987 = vpop.f32.mrb[0].mxu0
    %v988 = vpop.f32.mrb[0].mxu0
    %v989 = vadd.f32 %v892, %v988
    %v990 = vpop.f32.mrb[0].mxu0
    %991 = vmatprep.mubr.bf16.mxu0 0
    %992 = vmatmul.mubr.bf16.gmra.mrb[0].mxu0 %v756
    %v993 = vpop.f32.mrb[0].mxu0
    %v994 = vadd.f32 %v897, %v993
    %v995 = vpop.f32.mrb[0].mxu0
    %v996 = vpop.f32.mrb[0].mxu0
    %v997 = vadd.f32 %v900, %v996
    %v998 = vpop.f32.mrb[0].mxu0
    %999 = vdwg.mxu0
    %s1000 = scalar_lea.vmem [#allocation7], 128
    %v1001 = vld [vmem:[%s1000] sm:$0xf]
    %v1002 = vld [vmem:[%s1000 + $0x4] sm:$0xf]
    %v1003 = vld [vmem:[%s1000 + $0x8] sm:$0xf]
    %v1004 = vld [vmem:[%s1000 + $0xc] sm:$0xf]
    %v1005 = vld [vmem:[%s1000 + $0x10] sm:$0xf]
    %v1006 = vld [vmem:[%s1000 + $0x14] sm:$0xf]
    %v1007 = vld [vmem:[%s1000 + $0x18] sm:$0xf]
    %v1008 = vld [vmem:[%s1000 + $0x1c] sm:$0xf]
    %v1009 = vld [vmem:[%s1000 + $0x20] sm:$0xf]
    %v1010 = vld [vmem:[%s1000 + $0x24] sm:$0xf]
    %v1011 = vld [vmem:[%s1000 + $0x28] sm:$0xf]
    %v1012 = vld [vmem:[%s1000 + $0x2c] sm:$0xf]
    %v1013 = vld [vmem:[%s1000 + $0x30] sm:$0xf]
    %v1014 = vld [vmem:[%s1000 + $0x34] sm:$0xf]
    %v1015 = vld [vmem:[%s1000 + $0x38] sm:$0xf]
    %v1016 = vld [vmem:[%s1000 + $0x3c] sm:$0xf]
    %v1033 = vunpack.c.l.b16 %v1001
    %v1034 = vunpack.c.l.b16 %v1002
    %v1035 = vunpack.c.l.b16 %v1003
    %v1036 = vunpack.c.l.b16 %v1004
    %v1037 = vunpack.c.l.b16 %v1005
    %v1038 = vunpack.c.l.b16 %v1006
    %v1039 = vunpack.c.l.b16 %v1007
    %v1040 = vunpack.c.l.b16 %v1008
    %v1041 = vunpack.c.l.b16 %v1009
    %v1042 = vunpack.c.l.b16 %v1010
    %v1043 = vunpack.c.l.b16 %v1011
    %v1044 = vunpack.c.l.b16 %v1012
    %v1045 = vunpack.c.l.b16 %v1013
    %v1046 = vunpack.c.l.b16 %v1014
    %v1047 = vunpack.c.l.b16 %v1015
    %v1048 = vunpack.c.l.b16 %v1016
    %v1049 = vpack.c.b16 %v1034, %v1033
    %v1050 = vpack.c.b16 %v1036, %v1035
    %v1051 = vpack.c.b16 %v1038, %v1037
    %v1052 = vpack.c.b16 %v1040, %v1039
    %v1053 = vpack.c.b16 %v1042, %v1041
    %v1054 = vpack.c.b16 %v1044, %v1043
    %v1055 = vpack.c.b16 %v1046, %v1045
    %v1056 = vpack.c.b16 %v1048, %v1047
    %1065 = vmatprep.subr.bf16.mxu0 0
    %1066 = vmatpush1.bf16.msra.mxu0 %v1049
    %1067 = vmatprep.subr.bf16.mxu0 0
    %1068 = vmatpush1.bf16.msra.mxu0 %v1050
    %1069 = vmatprep.subr.bf16.mxu0 0
    %1070 = vmatpush1.bf16.msra.mxu0 %v1051
    %1071 = vmatprep.subr.bf16.mxu0 0
    %1072 = vmatpush1.bf16.msra.mxu0 %v1052
    %1073 = vmatprep.subr.bf16.mxu0 0
    %1074 = vmatpush1.bf16.msra.mxu0 %v1053
    %1075 = vmatprep.subr.bf16.mxu0 0
    %1076 = vmatpush1.bf16.msra.mxu0 %v1054
    %1077 = vmatprep.subr.bf16.mxu0 0
    %1078 = vmatpush1.bf16.msra.mxu0 %v1055
    %1079 = vmatprep.subr.bf16.mxu0 0
    %1080 = vmatpush1.bf16.msra.mxu0 %v1056
    %1081 = vmatprep.subr.bf16.mxu0 0
    %1082 = vmatpush1.bf16.msra.mxu0 0
    %1083 = vmatprep.subr.bf16.mxu0 0
    %1084 = vmatpush1.bf16.msra.mxu0 0
    %1085 = vmatprep.subr.bf16.mxu0 0
    %1086 = vmatpush1.bf16.msra.mxu0 0
    %1087 = vmatprep.subr.bf16.mxu0 0
    %1088 = vmatpush1.bf16.msra.mxu0 0
    %1089 = vmatprep.subr.bf16.mxu0 0
    %1090 = vmatpush1.bf16.msra.mxu0 0
    %1091 = vmatprep.subr.bf16.mxu0 0
    %1092 = vmatpush1.bf16.msra.mxu0 0
    %1093 = vmatprep.subr.bf16.mxu0 0
    %1094 = vmatpush1.bf16.msra.mxu0 0
    %1095 = vmatprep.subr.bf16.mxu0 0
    %1096 = vmatpush1.bf16.msra.mxu0 0
    %1097 = vmatprep.mubr.bf16.mxu0 0
    %1098 = vmatmul.mubr.bf16.gmra.mrb[0].mxu0 %v771
    %v1099 = vpop.f32.mrb[0].mxu0
    %v1100 = vadd.f32 0.0, %v1099
    %v1101 = vpop.f32.mrb[0].mxu0
    %v1102 = vpop.f32.mrb[0].mxu0
    %v1103 = vadd.f32 0.0, %v1102
    %v1104 = vpop.f32.mrb[0].mxu0
    %1105 = vmatprep.mubr.bf16.mxu0 0
    %1106 = vmatmul.mubr.bf16.gmra.mrb[0].mxu0 %v772
    %v1107 = vpop.f32.mrb[0].mxu0
    %v1108 = vadd.f32 0.0, %v1107
    %v1109 = vpop.f32.mrb[0].mxu0
    %v1110 = vpop.f32.mrb[0].mxu0
    %v1111 = vadd.f32 0.0, %v1110
    %v1112 = vpop.f32.mrb[0].mxu0
    %1113 = vdwg.mxu0
    %v1114 = vadd.f32 %v986, %v1100
    %v1115 = vadd.f32 %v989, %v1103
    %v1116 = vadd.f32 %v994, %v1108
    %v1117 = vadd.f32 %v997, %v1111
    %v1118 = vadd.f32 %v1114, %v1115
    %v1119 = vadd.f32 %v1118, %v1116
    %v1120 = vadd.f32 %v1119, %v1117
    %v1121 = vrot.slane %v1120, 4
    %v1122 = vadd.f32 %v1120, %v1121
    %v1123 = vrot.slane %v1122, 2
    %v1124 = vadd.f32 %v1122, %v1123
    %v1125 = vrot.slane %v1124, 1
    %v1126 = vadd.f32 %v1124, %v1125
    %v1127 = vmul.f32 %v1114, %v1114
    %v1128 = vmul.f32 %v1115, %v1115
    %v1129 = vmul.f32 %v1116, %v1116
    %v1130 = vmul.f32 %v1117, %v1117
    %v1131 = vadd.f32 %v1127, %v1128
    %v1132 = vadd.f32 %v1131, %v1129
    %v1133 = vadd.f32 %v1132, %v1130
    %v1134 = vrot.slane %v1133, 4
    %v1135 = vadd.f32 %v1133, %v1134
    %v1136 = vrot.slane %v1135, 2
    %v1137 = vadd.f32 %v1135, %v1136
    %v1138 = vrot.slane %v1137, 1
    %v1139 = vadd.f32 %v1137, %v1138
    %1140 = vmatprep.subr.mxu0 0.0
    %1141 = vmatpush1.msra.mxu0 %v550
    %1142 = vmatprep.subr.mxu0 0.0
    %1143 = vmatpush1.msra.mxu0 %v551
    %1144 = vmatprep.subr.mxu0 0.0
    %1145 = vmatpush1.msra.mxu0 %v552
    %1146 = vmatprep.subr.mxu0 0.0
    %1147 = vmatpush1.msra.mxu0 %v553
    %1148 = vmatprep.subr.mxu0 0.0
    %1149 = vmatpush1.msra.mxu0 %v554
    %1150 = vmatprep.subr.mxu0 0.0
    %1151 = vmatpush1.msra.mxu0 %v555
    %1152 = vmatprep.subr.mxu0 0.0
    %1153 = vmatpush1.msra.mxu0 %v556
    %1154 = vmatprep.subr.mxu0 0.0
    %1155 = vmatpush1.msra.mxu0 %v557
    %1156 = vmatprep.subr.mxu0 0.0
    %1157 = vmatpush1.msra.mxu0 %v558
    %1158 = vmatprep.subr.mxu0 0.0
    %1159 = vmatpush1.msra.mxu0 %v559
    %1160 = vmatprep.subr.mxu0 0.0
    %1161 = vmatpush1.msra.mxu0 %v560
    %1162 = vmatprep.subr.mxu0 0.0
    %1163 = vmatpush1.msra.mxu0 %v561
    %1164 = vmatprep.subr.mxu0 0.0
    %1165 = vmatpush1.msra.mxu0 %v562
    %1166 = vmatprep.subr.mxu0 0.0
    %1167 = vmatpush1.msra.mxu0 %v563
    %1168 = vmatprep.subr.mxu0 0.0
    %1169 = vmatpush1.msra.mxu0 %v564
    %1170 = vmatprep.subr.mxu0 0.0
    %1171 = vmatpush1.msra.mxu0 %v565
    %1172 = vmatprep.subr.mxu0 0.0
    %1173 = vmatpush1.msra.mxu0 0.0
    %1174 = vmatprep.subr.mxu0 0.0
    %1175 = vmatpush1.msra.mxu0 0.0
    %1176 = vmatprep.subr.mxu0 0.0
    %1177 = vmatpush1.msra.mxu0 0.0
    %1178 = vmatprep.subr.mxu0 0.0
    %1179 = vmatpush1.msra.mxu0 0.0
    %1180 = vmatprep.subr.mxu0 0.0
    %1181 = vmatpush1.msra.mxu0 0.0
    %1182 = vmatprep.subr.mxu0 0.0
    %1183 = vmatpush1.msra.mxu0 0.0
    %1184 = vmatprep.subr.mxu0 0.0
    %1185 = vmatpush1.msra.mxu0 0.0
    %1186 = vmatprep.subr.mxu0 0.0
    %1187 = vmatpush1.msra.mxu0 0.0
    %1188 = vmatprep.subr.mxu0 0.0
    %1189 = vmatpush1.msra.mxu0 0.0
    %1190 = vmatprep.subr.mxu0 0.0
    %1191 = vmatpush1.msra.mxu0 0.0
    %1192 = vmatprep.subr.mxu0 0.0
    %1193 = vmatpush1.msra.mxu0 0.0
    %1194 = vmatprep.subr.mxu0 0.0
    %1195 = vmatpush1.msra.mxu0 0.0
    %1196 = vmatprep.subr.mxu0 0.0
    %1197 = vmatpush1.msra.mxu0 0.0
    %1198 = vmatprep.subr.mxu0 0.0
    %1199 = vmatpush1.msra.mxu0 0.0
    %1200 = vmatprep.subr.mxu0 0.0
    %1201 = vmatpush1.msra.mxu0 0.0
    %1202 = vmatprep.subr.mxu0 0.0
    %1203 = vmatpush1.msra.mxu0 0.0
    %1204 = vmatprep.mubr.f32.mxu0 0.0
    %1205 = vmatmul.mubr.f32.gmra.mrb[0].mxu0 %v1126
    %v1206 = vpop.f32.mrb[0].mxu0
    %v1207 = vadd.f32 0.0, %v1206
    %v1208 = vpop.f32.mrb[0].mxu0
    %1209 = vdwg.mxu0
    %1210 = vmatprep.subr.mxu0 0.0
    %1211 = vmatpush1.msra.mxu0 %v550
    %1212 = vmatprep.subr.mxu0 0.0
    %1213 = vmatpush1.msra.mxu0 %v551
    %1214 = vmatprep.subr.mxu0 0.0
    %1215 = vmatpush1.msra.mxu0 %v552
    %1216 = vmatprep.subr.mxu0 0.0
    %1217 = vmatpush1.msra.mxu0 %v553
    %1218 = vmatprep.subr.mxu0 0.0
    %1219 = vmatpush1.msra.mxu0 %v554
    %1220 = vmatprep.subr.mxu0 0.0
    %1221 = vmatpush1.msra.mxu0 %v555
    %1222 = vmatprep.subr.mxu0 0.0
    %1223 = vmatpush1.msra.mxu0 %v556
    %1224 = vmatprep.subr.mxu0 0.0
    %1225 = vmatpush1.msra.mxu0 %v557
    %1226 = vmatprep.subr.mxu0 0.0
    %1227 = vmatpush1.msra.mxu0 %v558
    %1228 = vmatprep.subr.mxu0 0.0
    %1229 = vmatpush1.msra.mxu0 %v559
    %1230 = vmatprep.subr.mxu0 0.0
    %1231 = vmatpush1.msra.mxu0 %v560
    %1232 = vmatprep.subr.mxu0 0.0
    %1233 = vmatpush1.msra.mxu0 %v561
    %1234 = vmatprep.subr.mxu0 0.0
    %1235 = vmatpush1.msra.mxu0 %v562
    %1236 = vmatprep.subr.mxu0 0.0
    %1237 = vmatpush1.msra.mxu0 %v563
    %1238 = vmatprep.subr.mxu0 0.0
    %1239 = vmatpush1.msra.mxu0 %v564
    %1240 = vmatprep.subr.mxu0 0.0
    %1241 = vmatpush1.msra.mxu0 %v565
    %1242 = vmatprep.subr.mxu0 0.0
    %1243 = vmatpush1.msra.mxu0 0.0
    %1244 = vmatprep.subr.mxu0 0.0
    %1245 = vmatpush1.msra.mxu0 0.0
    %1246 = vmatprep.subr.mxu0 0.0
    %1247 = vmatpush1.msra.mxu0 0.0
    %1248 = vmatprep.subr.mxu0 0.0
    %1249 = vmatpush1.msra.mxu0 0.0
    %1250 = vmatprep.subr.mxu0 0.0
    %1251 = vmatpush1.msra.mxu0 0.0
    %1252 = vmatprep.subr.mxu0 0.0
    %1253 = vmatpush1.msra.mxu0 0.0
    %1254 = vmatprep.subr.mxu0 0.0
    %1255 = vmatpush1.msra.mxu0 0.0
    %1256 = vmatprep.subr.mxu0 0.0
    %1257 = vmatpush1.msra.mxu0 0.0
    %1258 = vmatprep.subr.mxu0 0.0
    %1259 = vmatpush1.msra.mxu0 0.0
    %1260 = vmatprep.subr.mxu0 0.0
    %1261 = vmatpush1.msra.mxu0 0.0
    %1262 = vmatprep.subr.mxu0 0.0
    %1263 = vmatpush1.msra.mxu0 0.0
    %1264 = vmatprep.subr.mxu0 0.0
    %1265 = vmatpush1.msra.mxu0 0.0
    %1266 = vmatprep.subr.mxu0 0.0
    %1267 = vmatpush1.msra.mxu0 0.0
    %1268 = vmatprep.subr.mxu0 0.0
    %1269 = vmatpush1.msra.mxu0 0.0
    %1270 = vmatprep.subr.mxu0 0.0
    %1271 = vmatpush1.msra.mxu0 0.0
    %1272 = vmatprep.subr.mxu0 0.0
    %1273 = vmatpush1.msra.mxu0 0.0
    %1274 = vmatprep.mubr.f32.mxu0 0.0
    %1275 = vmatmul.mubr.f32.gmra.mrb[0].mxu0 %v1139
    %v1276 = vpop.f32.mrb[0].mxu0
    %v1277 = vadd.f32 0.0, %v1276
    %v1278 = vpop.f32.mrb[0].mxu0
    %1279 = vdwg.mxu0
    %v1280 = vmul.f32 %v1207, %v1207
    %v1281 = vsub.f32 %v1277, %v1280
    %v1282 = vadd.f32 %v1281, 1e-05
    %v1283 = vrsqrt.pop %v1282
    %v1284 = vlaneseq
    %v1285 = vshrl.u32 %v1284, 7
    %v1286 = vsub.s32 0, %v1285
    %v1287 = vrot.slane %v1207, %v1286
    %v1288 = vsub.f32 %v1114, %v1287
    %v1289 = vsub.f32 %v1115, %v1287
    %v1290 = vsub.f32 %v1116, %v1287
    %v1291 = vsub.f32 %v1117, %v1287
    %v1292 = vld [vmem:[%s5] sm:$0x1]
    %v1293 = vmul.f32 %v1283, %v1292
    %v1294 = vlaneseq
    %v1295 = vshrl.u32 %v1294, 7
    %v1296 = vsub.s32 0, %v1295
    %v1297 = vrot.slane %v1293, %v1296
    %v1298 = vmul.f32 %v1288, %v1297
    %v1299 = vmul.f32 %v1289, %v1297
    %v1300 = vmul.f32 %v1290, %v1297
    %v1301 = vmul.f32 %v1291, %v1297
    %v1302 = vld [vmem:[%s6] sm:$0x1]
    %v1304 = vlaneseq
    %v1305 = vshrl.u32 %v1304, 7
    %v1306 = vsub.s32 0, %v1305
    %v1307 = vrot.slane %v1302, %v1306
    %v1309 = vadd.f32 %v1298, %v1307
    %v1310 = vadd.f32 %v1299, %v1307
    %v1311 = vadd.f32 %v1300, %v1307
    %v1312 = vadd.f32 %v1301, %v1307
    %v1313 = vadd.f32 %v1309, %v86
    %v1314 = vadd.f32 %v1310, %v87
    %v1315 = vadd.f32 %v1311, %v88
    %v1316 = vadd.f32 %v1312, %v89
    %v1317 = vmax.f32 %v1313, 0.0
    %v1318 = vmax.f32 %v1314, 0.0
    %v1319 = vmax.f32 %v1315, 0.0
    %v1320 = vmax.f32 %v1316, 0.0
    %1321 = vst [vmem:[#allocation10] sm:$0xff] %v1317
    %1322 = vst [vmem:[#allocation10 + $0x8] sm:$0xff] %v1318
    %1323 = vst [vmem:[#allocation10 + $0x10] sm:$0xff] %v1319
    %1324 = vst [vmem:[#allocation10 + $0x18] sm:$0xff] %v1320
    // Predicated region
    $region50: #{tpu_custom_call.1} parent=1 // pred_check
      _
    $region51: #{tpu_custom_call.1} parent=1 // pred_check_branch
      %1326 = sbr.rel (0) target = $region53
    $region52: #{tpu_custom_call.1} parent=1 // pred_region
      %s1328 = ssub.s32 512, 512
      %1329 = vsyncadd [#allocation4], %s1328
      %s1330 = sshll.u32 [#allocation10], 4
      %s1331 = int_to_ptr.vmem [resolvable:$true] %s1330
      %1336 = dma.vmem_to_hbm [thread:$0]  %s1331, 512, %s8, [#allocation4], 128, 128, 8
    $region53: #{tpu_custom_call.1} parent=1 // pred_fallthru
      _
    // Predicated region
    $region54: #{tpu_custom_call.1} parent=1 // pred_check
      _
    $region55: #{tpu_custom_call.1} parent=1 // pred_check_branch
      %1338 = sbr.rel (0) target = $region57
    $region56: #{tpu_custom_call.1} parent=1 // pred_region
      %1339 = dma.done [#allocation4], 512
    $region57: #{tpu_custom_call.1} parent=1 // pred_fallthru
      _
    %1340 = vsyncpa [#allocation3], 1
    %1341 = vsyncpa [#allocation6], 1
    %1342 = vsyncpa [#allocation9], 1
    %1343 = vsyncpa [#allocation4], 1

</llo_original>
